<compile_context>
chip_gen: v5e
topology: v5e:2x2
jax: 0.10.0
libtpu: 0.0.40
codegen_flags: <defaults>
</compile_context>

<pallas_src>
import numpy as np
import jax
import jax.numpy as jnp
from jax.experimental import pallas as pl
from jax.experimental.pallas import tpu as pltpu  # noqa: F401  (kept for TPU-specific tuning hooks)

# -------------------- config --------------------
DIM = 8
N_LAYERS = 2
NUM_SCALES = 2
INPUT_DIM = 4
LRELU_SLOPE = 0.2        # activ = 'lrelu'
KSIZE = 4                # every strided conv is 4x4, stride 2, reflect pad 1
T_TAPS = KSIZE * KSIZE


# -------------------- static operator construction (numpy, trace time) ----------
def _reflect(p, n):
    if p < 0:
        return -p
    if p > n - 1:
        return 2 * (n - 1) - p
    return p


def _conv_gather_op(H, W):
    """G[h*W+w, t*HoWo + i*Wo + j] = 1 iff input pixel (h, w) is the source of
    tap t = kh*4+kw for output pixel (i, j) of a 4x4 / stride-2 / reflect-pad-1
    convolution (gather-first layout: taps glued to the output columns)."""
    Ho, Wo = H // 2, W // 2
    g = np.zeros((H * W, T_TAPS * Ho * Wo), np.float32)
    for kh in range(KSIZE):
        for kw in range(KSIZE):
            t = kh * KSIZE + kw
            for i in range(Ho):
                hh = _reflect(2 * i + kh - 1, H)
                for j in range(Wo):
                    ww = _reflect(2 * j + kw - 1, W)
                    g[hh * W + ww, t * (Ho * Wo) + i * Wo + j] = 1.0
    return g


def _avgpool_op(H, W):
    """A^T for AvgPool2d(3, stride=2, padding=1, count_include_pad=False):
    shape (H*W, Ho*Wo); normalization by the valid-count folded in."""
    def axis_mat(n):
        no = (n - 1) // 2 + 1
        m = np.zeros((no, n), np.float32)
        for i in range(no):
            taps = [h for h in (2 * i - 1, 2 * i, 2 * i + 1) if 0 <= h < n]
            for h in taps:
                m[i, h] = 1.0 / len(taps)
        return m
    return np.ascontiguousarray(np.kron(axis_mat(H), axis_mat(W)).T)


def _bilinear_op(h_in, w_in, h_out, w_out):
    """R^T for F.interpolate(mode='bilinear', align_corners=True):
    shape (h_in*w_in, h_out*w_out)."""
    def axis_mat(no, ni):
        m = np.zeros((no, ni), np.float32)
        for i in range(no):
            src = 0.0 if no == 1 else i * (ni - 1) / (no - 1)
            i0 = min(max(int(np.floor(src)), 0), ni - 1)
            i1 = min(i0 + 1, ni - 1)
            f = src - i0
            m[i, i0] += 1.0 - f
            m[i, i1] += f
        return m
    return np.ascontiguousarray(
        np.kron(axis_mat(h_out, h_in), axis_mat(w_out, w_in)).T)


# -------------------- wrapper-side weight packing (layout plumbing) -------------
def _conv_weight_bd(w, b, n):
    """PyTorch conv weight (Cout, Cin, 4, 4) -> block-diag-over-batch mix matrix
    (n*Cout, T*n*Cin) matching the regrouped gather rows (t, n, ci); bias tiled
    over the batch to (n*Cout, 1)."""
    cout, cin = w.shape[0], w.shape[1]
    w2 = jnp.transpose(w, (2, 3, 0, 1)).reshape(T_TAPS, cout, cin).astype(jnp.float32)
    eye = jnp.eye(n, dtype=jnp.float32)
    wbd = jnp.einsum('nm,toc->notmc', eye, w2).reshape(n * cout, T_TAPS * n * cin)
    bt = jnp.tile(b.reshape(cout, 1).astype(jnp.float32), (n, 1))
    return wbd, bt


def _final_weight_bd(wf, bf, n):
    """1x1 conv (1, Cin, 1, 1) -> block-diag-over-batch (n, n*Cin) + (1,1) bias."""
    c = wf.reshape(-1).astype(jnp.float32)
    eye = jnp.eye(n, dtype=jnp.float32)
    wbd = jnp.einsum('nm,c->nmc', eye, c).reshape(n, n * c.shape[0])
    return wbd, bf.reshape(1, 1).astype(jnp.float32)


# -------------------- forward: one fused pallas_call --------------------
def ms_image_dis_forward(params, x_nchw):
    N, C, H, W = x_nchw.shape
    H1, W1 = H // 2, W // 2          # after scale-0 conv0 / after downsample
    H2, W2 = H1 // 2, W1 // 2        # scale-0 final map resolution
    H3, W3 = H2 // 2, W2 // 2        # scale-1 final map resolution

    # Activations live as (batch*channels, H*W): spatial on lanes, rows n-major.
    x2 = x_nchw.reshape(N * C, H * W).astype(jnp.float32)

    # Static operators (trace-time constants). One-hot gathers in bf16 (exact).
    gA = jnp.asarray(_conv_gather_op(H, W), dtype=jnp.bfloat16)      # (256, 1024)
    gB = jnp.asarray(_conv_gather_op(H1, W1), dtype=jnp.bfloat16)    # (64, 256) shared
    gC = jnp.asarray(_conv_gather_op(H2, W2), dtype=jnp.bfloat16)    # (16, 64)
    pool = jnp.asarray(_avgpool_op(H, W))                            # (256, 64) f32
    rz = jnp.asarray(_bilinear_op(H2, W2, H3, W3))                   # (16, 4)  f32

    (w00, b00), (w01, b01) = params[0]["convs"]
    wf0, bf0 = params[0]["final"]
    (w10, b10), (w11, b11) = params[1]["convs"]
    wf1, bf1 = params[1]["final"]

    W00, B00 = _conv_weight_bd(w00, b00, N)
    W01, B01 = _conv_weight_bd(w01, b01, N)
    W10, B10 = _conv_weight_bd(w10, b10, N)
    W11, B11 = _conv_weight_bd(w11, b11, N)
    WF0, BF0 = _final_weight_bd(wf0, bf0, N)
    WF1, BF1 = _final_weight_bd(wf1, bf1, N)

    def kernel(x_ref, gA_ref, gB_ref, gC_ref, pool_ref, rz_ref,
               w00_ref, b00_ref, w01_ref, b01_ref, wf0_ref, bf0_ref,
               w10_ref, b10_ref, w11_ref, b11_ref, wf1_ref, bf1_ref,
               o_ref):

        def conv_lrelu(a, g_ref, w_ref, b_ref, howo):
            # (1) spatial gather on Cin-channel input: one 2-D MXU matmul.
            g = g_ref[...].astype(jnp.float32)               # 0/1, exact upcast from bf16
            y = jnp.dot(a, g, preferred_element_type=jnp.float32)   # (N*cin, T*howo)
            # (2) regroup per-tap column blocks into rows (t, n, ci):
            #     static lane slices + one sublane concat (no reshape/transpose).
            z = jnp.concatenate(
                [y[:, t * howo:(t + 1) * howo] for t in range(T_TAPS)], axis=0)
            # (3) fused channel-mix + tap-sum: single contraction, K = T*N*cin.
            o = jnp.dot(w_ref[...], z, preferred_element_type=jnp.float32) + b_ref[...]
            return jnp.where(o >= 0.0, o, LRELU_SLOPE * o)   # LeakyReLU(0.2)

        x = x_ref[...]                                       # (N*Cin, H*W)

        # ----- scale 0 -----
        h = conv_lrelu(x, gA_ref, w00_ref, b00_ref, H1 * W1)        # (N*8, 64)
        h = conv_lrelu(h, gB_ref, w01_ref, b01_ref, H2 * W2)        # (N*16, 16)
        out0 = jnp.dot(wf0_ref[...], h,
                       preferred_element_type=jnp.float32) + bf0_ref[...]   # (N, 16)

        # ----- AvgPool2d(3,2,1,count_include_pad=False) of the input -----
        xd = jnp.dot(x, pool_ref[...], preferred_element_type=jnp.float32)  # (N*Cin, 64)

        # ----- scale 1 -----
        h = conv_lrelu(xd, gB_ref, w10_ref, b10_ref, H2 * W2)       # (N*8, 16)
        h = conv_lrelu(h, gC_ref, w11_ref, b11_ref, H3 * W3)        # (N*16, 4)
        out1 = jnp.dot(wf1_ref[...], h,
                       preferred_element_type=jnp.float32) + bf1_ref[...]   # (N, 4)

        # ----- bilinear(align_corners) resize of scale-0 map + add + sigmoid -----
        r = jnp.dot(out0, rz_ref[...], preferred_element_type=jnp.float32)  # (N, 4)
        v = (r + out1) * (1.0 / NUM_SCALES)
        o_ref[...] = 1.0 / (1.0 + jnp.exp(-v))

    operands = (x2, gA, gB, gC, pool, rz,
                W00, B00, W01, B01, WF0, BF0,
                W10, B10, W11, B11, WF1, BF1)

    # Advisory cost estimate for the XLA scheduler (matmul dims of the kernel).
    mm = [
        (N * C, H * W, T_TAPS * H1 * W1), (N * DIM, T_TAPS * N * C, H1 * W1),
        (N * DIM, H1 * W1, T_TAPS * H2 * W2), (N * 2 * DIM, T_TAPS * N * DIM, H2 * W2),
        (N, N * 2 * DIM, H2 * W2),
        (N * C, H * W, H1 * W1),
        (N * C, H1 * W1, T_TAPS * H2 * W2), (N * DIM, T_TAPS * N * C, H2 * W2),
        (N * DIM, H2 * W2, T_TAPS * H3 * W3), (N * 2 * DIM, T_TAPS * N * DIM, H3 * W3),
        (N, N * 2 * DIM, H3 * W3),
        (N, H2 * W2, H3 * W3),
    ]
    cost = pl.CostEstimate(
        flops=int(sum(2 * m * k * n for m, k, n in mm)),
        transcendentals=int(N * H3 * W3),
        bytes_accessed=int(sum(a.size * a.dtype.itemsize for a in operands)
                           + N * H3 * W3 * 4),
    )

    # Single grid step (grid=()): whole batch + all constants resident in VMEM,
    # default whole-array blocks; one launch, no HBM round trips between stages.
    out = pl.pallas_call(
        kernel,
        out_shape=jax.ShapeDtypeStruct((N, H3 * W3), jnp.float32),
        cost_estimate=cost,
    )(*operands)

    return out.reshape(N, 1, H3, W3)                 # NCHW


# -------------------- deterministic parameter init --------------------
def init_params(key):
    params = []
    for _ in range(NUM_SCALES):
        convs = []
        cin, cout = INPUT_DIM, DIM
        for _ in range(N_LAYERS):
            key, kw, kb = jax.random.split(key, 3)
            w = 0.05 * jax.random.normal(kw, (cout, cin, 4, 4), jnp.float32)
            b = 0.05 * jax.random.normal(kb, (cout,), jnp.float32)
            convs.append((w, b))
            cin, cout = cout, cout * 2
        key, kw, kb = jax.random.split(key, 3)
        wf = 0.05 * jax.random.normal(kw, (1, cin, 1, 1), jnp.float32)
        bf = 0.05 * jax.random.normal(kb, (1,), jnp.float32)
        params.append({"convs": convs, "final": (wf, bf)})
    return params


if __name__ == "__main__":
    key = jax.random.PRNGKey(0)
    pkey, xkey = jax.random.split(key)
    params = init_params(pkey)
    x = jax.random.normal(xkey, (2, INPUT_DIM, 16, 16), jnp.float32)  # NCHW input
    fwd = jax.jit(ms_image_dis_forward)
    y = fwd(params, x)
    jax.block_until_ready(y)
    assert y.shape == (2, 1, 2, 2), y.shape
    assert bool(jnp.all(jnp.isfinite(y)))
    print("KERNEL_OK")
</pallas_src>

<mosaic_0001>
module attributes {stable_mosaic.version = 11 : i64} {
  func.func @kernel(%arg0: memref<8x256xf32, #tpu.memory_space<vmem>>, %arg1: memref<256x1024xbf16, #tpu.memory_space<vmem>>, %arg2: memref<64x256xbf16, #tpu.memory_space<vmem>>, %arg3: memref<16x64xbf16, #tpu.memory_space<vmem>>, %arg4: memref<256x64xf32, #tpu.memory_space<vmem>>, %arg5: memref<16x4xf32, #tpu.memory_space<vmem>>, %arg6: memref<16x128xf32, #tpu.memory_space<vmem>>, %arg7: memref<16x1xf32, #tpu.memory_space<vmem>>, %arg8: memref<32x256xf32, #tpu.memory_space<vmem>>, %arg9: memref<32x1xf32, #tpu.memory_space<vmem>>, %arg10: memref<2x32xf32, #tpu.memory_space<vmem>>, %arg11: memref<1x1xf32, #tpu.memory_space<vmem>>, %arg12: memref<16x128xf32, #tpu.memory_space<vmem>>, %arg13: memref<16x1xf32, #tpu.memory_space<vmem>>, %arg14: memref<32x256xf32, #tpu.memory_space<vmem>>, %arg15: memref<32x1xf32, #tpu.memory_space<vmem>>, %arg16: memref<2x32xf32, #tpu.memory_space<vmem>>, %arg17: memref<1x1xf32, #tpu.memory_space<vmem>>, %arg18: memref<2x4xf32, #tpu.memory_space<vmem>>) attributes {dimension_semantics = [], scalar_prefetch = 0 : i64, scratch_operands = 0 : i64, tpu.core_type = #tpu.core_type<tc>} {
    %c0 = arith.constant 0 : index
    %c0_0 = arith.constant 0 : index
    %0 = vector.load %arg0[%c0, %c0_0] : memref<8x256xf32, #tpu.memory_space<vmem>>, vector<8x256xf32>
    %c0_1 = arith.constant 0 : index
    %c0_2 = arith.constant 0 : index
    %1 = vector.load %arg1[%c0_1, %c0_2] : memref<256x1024xbf16, #tpu.memory_space<vmem>>, vector<256x1024xbf16>
    %2 = arith.extf %1 : vector<256x1024xbf16> to vector<256x1024xf32>
    %cst = arith.constant dense<0.000000e+00> : vector<8x1024xf32>
    %3 = tpu.matmul %0, %2, %cst {dimension_numbers = #tpu.dot_dimension_numbers<[1], [0], [0], [1], [0, 0, 1, 1], [], []>} : vector<8x256xf32>, vector<256x1024xf32>, vector<8x1024xf32> -> vector<8x1024xf32>
    %4 = vector.extract_strided_slice %3 {offsets = [0, 0], sizes = [8, 64], strides = [1, 1]} : vector<8x1024xf32> to vector<8x64xf32>
    %5 = vector.extract_strided_slice %3 {offsets = [0, 64], sizes = [8, 64], strides = [1, 1]} : vector<8x1024xf32> to vector<8x64xf32>
    %6 = vector.extract_strided_slice %3 {offsets = [0, 128], sizes = [8, 64], strides = [1, 1]} : vector<8x1024xf32> to vector<8x64xf32>
    %7 = vector.extract_strided_slice %3 {offsets = [0, 192], sizes = [8, 64], strides = [1, 1]} : vector<8x1024xf32> to vector<8x64xf32>
    %8 = vector.extract_strided_slice %3 {offsets = [0, 256], sizes = [8, 64], strides = [1, 1]} : vector<8x1024xf32> to vector<8x64xf32>
    %9 = vector.extract_strided_slice %3 {offsets = [0, 320], sizes = [8, 64], strides = [1, 1]} : vector<8x1024xf32> to vector<8x64xf32>
    %10 = vector.extract_strided_slice %3 {offsets = [0, 384], sizes = [8, 64], strides = [1, 1]} : vector<8x1024xf32> to vector<8x64xf32>
    %11 = vector.extract_strided_slice %3 {offsets = [0, 448], sizes = [8, 64], strides = [1, 1]} : vector<8x1024xf32> to vector<8x64xf32>
    %12 = vector.extract_strided_slice %3 {offsets = [0, 512], sizes = [8, 64], strides = [1, 1]} : vector<8x1024xf32> to vector<8x64xf32>
    %13 = vector.extract_strided_slice %3 {offsets = [0, 576], sizes = [8, 64], strides = [1, 1]} : vector<8x1024xf32> to vector<8x64xf32>
    %14 = vector.extract_strided_slice %3 {offsets = [0, 640], sizes = [8, 64], strides = [1, 1]} : vector<8x1024xf32> to vector<8x64xf32>
    %15 = vector.extract_strided_slice %3 {offsets = [0, 704], sizes = [8, 64], strides = [1, 1]} : vector<8x1024xf32> to vector<8x64xf32>
    %16 = vector.extract_strided_slice %3 {offsets = [0, 768], sizes = [8, 64], strides = [1, 1]} : vector<8x1024xf32> to vector<8x64xf32>
    %17 = vector.extract_strided_slice %3 {offsets = [0, 832], sizes = [8, 64], strides = [1, 1]} : vector<8x1024xf32> to vector<8x64xf32>
    %18 = vector.extract_strided_slice %3 {offsets = [0, 896], sizes = [8, 64], strides = [1, 1]} : vector<8x1024xf32> to vector<8x64xf32>
    %19 = vector.extract_strided_slice %3 {offsets = [0, 960], sizes = [8, 64], strides = [1, 1]} : vector<8x1024xf32> to vector<8x64xf32>
    %20 = tpu.concatenate %4, %5, %6, %7, %8, %9, %10, %11, %12, %13, %14, %15, %16, %17, %18, %19 in 0 : vector<8x64xf32>, vector<8x64xf32>, vector<8x64xf32>, vector<8x64xf32>, vector<8x64xf32>, vector<8x64xf32>, vector<8x64xf32>, vector<8x64xf32>, vector<8x64xf32>, vector<8x64xf32>, vector<8x64xf32>, vector<8x64xf32>, vector<8x64xf32>, vector<8x64xf32>, vector<8x64xf32>, vector<8x64xf32> -> vector<128x64xf32>
    %c0_3 = arith.constant 0 : index
    %c0_4 = arith.constant 0 : index
    %21 = vector.load %arg6[%c0_3, %c0_4] : memref<16x128xf32, #tpu.memory_space<vmem>>, vector<16x128xf32>
    %cst_5 = arith.constant dense<0.000000e+00> : vector<16x64xf32>
    %22 = tpu.matmul %21, %20, %cst_5 {dimension_numbers = #tpu.dot_dimension_numbers<[1], [0], [0], [1], [0, 0, 1, 1], [], []>} : vector<16x128xf32>, vector<128x64xf32>, vector<16x64xf32> -> vector<16x64xf32>
    %c0_6 = arith.constant 0 : index
    %c0_7 = arith.constant 0 : index
    %23 = vector.load %arg7[%c0_6, %c0_7] : memref<16x1xf32, #tpu.memory_space<vmem>>, vector<16x1xf32>
    %24 = vector.broadcast %23 : vector<16x1xf32> to vector<16x64xf32>
    %25 = arith.addf %22, %24 : vector<16x64xf32>
    %cst_8 = arith.constant 0.000000e+00 : f32
    %26 = vector.broadcast %cst_8 : f32 to vector<16x64xf32>
    %27 = arith.cmpf oge, %25, %26 : vector<16x64xf32>
    %cst_9 = arith.constant 2.000000e-01 : f32
    %28 = vector.broadcast %cst_9 : f32 to vector<16x64xf32>
    %29 = arith.mulf %28, %25 : vector<16x64xf32>
    %30 = arith.select %27, %25, %29 : vector<16x64xi1>, vector<16x64xf32>
    %c0_10 = arith.constant 0 : index
    %c0_11 = arith.constant 0 : index
    %31 = vector.load %arg2[%c0_10, %c0_11] : memref<64x256xbf16, #tpu.memory_space<vmem>>, vector<64x256xbf16>
    %32 = arith.extf %31 : vector<64x256xbf16> to vector<64x256xf32>
    %cst_12 = arith.constant dense<0.000000e+00> : vector<16x256xf32>
    %33 = tpu.matmul %30, %32, %cst_12 {dimension_numbers = #tpu.dot_dimension_numbers<[1], [0], [0], [1], [0, 0, 1, 1], [], []>} : vector<16x64xf32>, vector<64x256xf32>, vector<16x256xf32> -> vector<16x256xf32>
    %34 = vector.extract_strided_slice %33 {offsets = [0, 0], sizes = [16, 16], strides = [1, 1]} : vector<16x256xf32> to vector<16x16xf32>
    %35 = vector.extract_strided_slice %33 {offsets = [0, 16], sizes = [16, 16], strides = [1, 1]} : vector<16x256xf32> to vector<16x16xf32>
    %36 = vector.extract_strided_slice %33 {offsets = [0, 32], sizes = [16, 16], strides = [1, 1]} : vector<16x256xf32> to vector<16x16xf32>
    %37 = vector.extract_strided_slice %33 {offsets = [0, 48], sizes = [16, 16], strides = [1, 1]} : vector<16x256xf32> to vector<16x16xf32>
    %38 = vector.extract_strided_slice %33 {offsets = [0, 64], sizes = [16, 16], strides = [1, 1]} : vector<16x256xf32> to vector<16x16xf32>
    %39 = vector.extract_strided_slice %33 {offsets = [0, 80], sizes = [16, 16], strides = [1, 1]} : vector<16x256xf32> to vector<16x16xf32>
    %40 = vector.extract_strided_slice %33 {offsets = [0, 96], sizes = [16, 16], strides = [1, 1]} : vector<16x256xf32> to vector<16x16xf32>
    %41 = vector.extract_strided_slice %33 {offsets = [0, 112], sizes = [16, 16], strides = [1, 1]} : vector<16x256xf32> to vector<16x16xf32>
    %42 = vector.extract_strided_slice %33 {offsets = [0, 128], sizes = [16, 16], strides = [1, 1]} : vector<16x256xf32> to vector<16x16xf32>
    %43 = vector.extract_strided_slice %33 {offsets = [0, 144], sizes = [16, 16], strides = [1, 1]} : vector<16x256xf32> to vector<16x16xf32>
    %44 = vector.extract_strided_slice %33 {offsets = [0, 160], sizes = [16, 16], strides = [1, 1]} : vector<16x256xf32> to vector<16x16xf32>
    %45 = vector.extract_strided_slice %33 {offsets = [0, 176], sizes = [16, 16], strides = [1, 1]} : vector<16x256xf32> to vector<16x16xf32>
    %46 = vector.extract_strided_slice %33 {offsets = [0, 192], sizes = [16, 16], strides = [1, 1]} : vector<16x256xf32> to vector<16x16xf32>
    %47 = vector.extract_strided_slice %33 {offsets = [0, 208], sizes = [16, 16], strides = [1, 1]} : vector<16x256xf32> to vector<16x16xf32>
    %48 = vector.extract_strided_slice %33 {offsets = [0, 224], sizes = [16, 16], strides = [1, 1]} : vector<16x256xf32> to vector<16x16xf32>
    %49 = vector.extract_strided_slice %33 {offsets = [0, 240], sizes = [16, 16], strides = [1, 1]} : vector<16x256xf32> to vector<16x16xf32>
    %50 = tpu.concatenate %34, %35, %36, %37, %38, %39, %40, %41, %42, %43, %44, %45, %46, %47, %48, %49 in 0 : vector<16x16xf32>, vector<16x16xf32>, vector<16x16xf32>, vector<16x16xf32>, vector<16x16xf32>, vector<16x16xf32>, vector<16x16xf32>, vector<16x16xf32>, vector<16x16xf32>, vector<16x16xf32>, vector<16x16xf32>, vector<16x16xf32>, vector<16x16xf32>, vector<16x16xf32>, vector<16x16xf32>, vector<16x16xf32> -> vector<256x16xf32>
    %c0_13 = arith.constant 0 : index
    %c0_14 = arith.constant 0 : index
    %51 = vector.load %arg8[%c0_13, %c0_14] : memref<32x256xf32, #tpu.memory_space<vmem>>, vector<32x256xf32>
    %cst_15 = arith.constant dense<0.000000e+00> : vector<32x16xf32>
    %52 = tpu.matmul %51, %50, %cst_15 {dimension_numbers = #tpu.dot_dimension_numbers<[1], [0], [0], [1], [0, 0, 1, 1], [], []>} : vector<32x256xf32>, vector<256x16xf32>, vector<32x16xf32> -> vector<32x16xf32>
    %c0_16 = arith.constant 0 : index
    %c0_17 = arith.constant 0 : index
    %53 = vector.load %arg9[%c0_16, %c0_17] : memref<32x1xf32, #tpu.memory_space<vmem>>, vector<32x1xf32>
    %54 = vector.broadcast %53 : vector<32x1xf32> to vector<32x16xf32>
    %55 = arith.addf %52, %54 : vector<32x16xf32>
    %cst_18 = arith.constant 0.000000e+00 : f32
    %56 = vector.broadcast %cst_18 : f32 to vector<32x16xf32>
    %57 = arith.cmpf oge, %55, %56 : vector<32x16xf32>
    %cst_19 = arith.constant 2.000000e-01 : f32
    %58 = vector.broadcast %cst_19 : f32 to vector<32x16xf32>
    %59 = arith.mulf %58, %55 : vector<32x16xf32>
    %60 = arith.select %57, %55, %59 : vector<32x16xi1>, vector<32x16xf32>
    %c0_20 = arith.constant 0 : index
    %c0_21 = arith.constant 0 : index
    %61 = vector.load %arg10[%c0_20, %c0_21] : memref<2x32xf32, #tpu.memory_space<vmem>>, vector<2x32xf32>
    %cst_22 = arith.constant dense<0.000000e+00> : vector<2x16xf32>
    %62 = tpu.matmul %61, %60, %cst_22 {dimension_numbers = #tpu.dot_dimension_numbers<[1], [0], [0], [1], [0, 0, 1, 1], [], []>} : vector<2x32xf32>, vector<32x16xf32>, vector<2x16xf32> -> vector<2x16xf32>
    %c0_23 = arith.constant 0 : index
    %c0_24 = arith.constant 0 : index
    %63 = vector.load %arg11[%c0_23, %c0_24] : memref<1x1xf32, #tpu.memory_space<vmem>>, vector<1x1xf32>
    %64 = vector.broadcast %63 : vector<1x1xf32> to vector<2x16xf32>
    %65 = arith.addf %62, %64 : vector<2x16xf32>
    %c0_25 = arith.constant 0 : index
    %c0_26 = arith.constant 0 : index
    %66 = vector.load %arg4[%c0_25, %c0_26] : memref<256x64xf32, #tpu.memory_space<vmem>>, vector<256x64xf32>
    %cst_27 = arith.constant dense<0.000000e+00> : vector<8x64xf32>
    %67 = tpu.matmul %0, %66, %cst_27 {dimension_numbers = #tpu.dot_dimension_numbers<[1], [0], [0], [1], [0, 0, 1, 1], [], []>} : vector<8x256xf32>, vector<256x64xf32>, vector<8x64xf32> -> vector<8x64xf32>
    %c0_28 = arith.constant 0 : index
    %c0_29 = arith.constant 0 : index
    %68 = vector.load %arg2[%c0_28, %c0_29] : memref<64x256xbf16, #tpu.memory_space<vmem>>, vector<64x256xbf16>
    %69 = arith.extf %68 : vector<64x256xbf16> to vector<64x256xf32>
    %cst_30 = arith.constant dense<0.000000e+00> : vector<8x256xf32>
    %70 = tpu.matmul %67, %69, %cst_30 {dimension_numbers = #tpu.dot_dimension_numbers<[1], [0], [0], [1], [0, 0, 1, 1], [], []>} : vector<8x64xf32>, vector<64x256xf32>, vector<8x256xf32> -> vector<8x256xf32>
    %71 = vector.extract_strided_slice %70 {offsets = [0, 0], sizes = [8, 16], strides = [1, 1]} : vector<8x256xf32> to vector<8x16xf32>
    %72 = vector.extract_strided_slice %70 {offsets = [0, 16], sizes = [8, 16], strides = [1, 1]} : vector<8x256xf32> to vector<8x16xf32>
    %73 = vector.extract_strided_slice %70 {offsets = [0, 32], sizes = [8, 16], strides = [1, 1]} : vector<8x256xf32> to vector<8x16xf32>
    %74 = vector.extract_strided_slice %70 {offsets = [0, 48], sizes = [8, 16], strides = [1, 1]} : vector<8x256xf32> to vector<8x16xf32>
    %75 = vector.extract_strided_slice %70 {offsets = [0, 64], sizes = [8, 16], strides = [1, 1]} : vector<8x256xf32> to vector<8x16xf32>
    %76 = vector.extract_strided_slice %70 {offsets = [0, 80], sizes = [8, 16], strides = [1, 1]} : vector<8x256xf32> to vector<8x16xf32>
    %77 = vector.extract_strided_slice %70 {offsets = [0, 96], sizes = [8, 16], strides = [1, 1]} : vector<8x256xf32> to vector<8x16xf32>
    %78 = vector.extract_strided_slice %70 {offsets = [0, 112], sizes = [8, 16], strides = [1, 1]} : vector<8x256xf32> to vector<8x16xf32>
    %79 = vector.extract_strided_slice %70 {offsets = [0, 128], sizes = [8, 16], strides = [1, 1]} : vector<8x256xf32> to vector<8x16xf32>
    %80 = vector.extract_strided_slice %70 {offsets = [0, 144], sizes = [8, 16], strides = [1, 1]} : vector<8x256xf32> to vector<8x16xf32>
    %81 = vector.extract_strided_slice %70 {offsets = [0, 160], sizes = [8, 16], strides = [1, 1]} : vector<8x256xf32> to vector<8x16xf32>
    %82 = vector.extract_strided_slice %70 {offsets = [0, 176], sizes = [8, 16], strides = [1, 1]} : vector<8x256xf32> to vector<8x16xf32>
    %83 = vector.extract_strided_slice %70 {offsets = [0, 192], sizes = [8, 16], strides = [1, 1]} : vector<8x256xf32> to vector<8x16xf32>
    %84 = vector.extract_strided_slice %70 {offsets = [0, 208], sizes = [8, 16], strides = [1, 1]} : vector<8x256xf32> to vector<8x16xf32>
    %85 = vector.extract_strided_slice %70 {offsets = [0, 224], sizes = [8, 16], strides = [1, 1]} : vector<8x256xf32> to vector<8x16xf32>
    %86 = vector.extract_strided_slice %70 {offsets = [0, 240], sizes = [8, 16], strides = [1, 1]} : vector<8x256xf32> to vector<8x16xf32>
    %87 = tpu.concatenate %71, %72, %73, %74, %75, %76, %77, %78, %79, %80, %81, %82, %83, %84, %85, %86 in 0 : vector<8x16xf32>, vector<8x16xf32>, vector<8x16xf32>, vector<8x16xf32>, vector<8x16xf32>, vector<8x16xf32>, vector<8x16xf32>, vector<8x16xf32>, vector<8x16xf32>, vector<8x16xf32>, vector<8x16xf32>, vector<8x16xf32>, vector<8x16xf32>, vector<8x16xf32>, vector<8x16xf32>, vector<8x16xf32> -> vector<128x16xf32>
    %c0_31 = arith.constant 0 : index
    %c0_32 = arith.constant 0 : index
    %88 = vector.load %arg12[%c0_31, %c0_32] : memref<16x128xf32, #tpu.memory_space<vmem>>, vector<16x128xf32>
    %cst_33 = arith.constant dense<0.000000e+00> : vector<16x16xf32>
    %89 = tpu.matmul %88, %87, %cst_33 {dimension_numbers = #tpu.dot_dimension_numbers<[1], [0], [0], [1], [0, 0, 1, 1], [], []>} : vector<16x128xf32>, vector<128x16xf32>, vector<16x16xf32> -> vector<16x16xf32>
    %c0_34 = arith.constant 0 : index
    %c0_35 = arith.constant 0 : index
    %90 = vector.load %arg13[%c0_34, %c0_35] : memref<16x1xf32, #tpu.memory_space<vmem>>, vector<16x1xf32>
    %91 = vector.broadcast %90 : vector<16x1xf32> to vector<16x16xf32>
    %92 = arith.addf %89, %91 : vector<16x16xf32>
    %cst_36 = arith.constant 0.000000e+00 : f32
    %93 = vector.broadcast %cst_36 : f32 to vector<16x16xf32>
    %94 = arith.cmpf oge, %92, %93 : vector<16x16xf32>
    %cst_37 = arith.constant 2.000000e-01 : f32
    %95 = vector.broadcast %cst_37 : f32 to vector<16x16xf32>
    %96 = arith.mulf %95, %92 : vector<16x16xf32>
    %97 = arith.select %94, %92, %96 : vector<16x16xi1>, vector<16x16xf32>
    %c0_38 = arith.constant 0 : index
    %c0_39 = arith.constant 0 : index
    %98 = vector.load %arg3[%c0_38, %c0_39] : memref<16x64xbf16, #tpu.memory_space<vmem>>, vector<16x64xbf16>
    %99 = arith.extf %98 : vector<16x64xbf16> to vector<16x64xf32>
    %cst_40 = arith.constant dense<0.000000e+00> : vector<16x64xf32>
    %100 = tpu.matmul %97, %99, %cst_40 {dimension_numbers = #tpu.dot_dimension_numbers<[1], [0], [0], [1], [0, 0, 1, 1], [], []>} : vector<16x16xf32>, vector<16x64xf32>, vector<16x64xf32> -> vector<16x64xf32>
    %101 = vector.extract_strided_slice %100 {offsets = [0, 0], sizes = [16, 4], strides = [1, 1]} : vector<16x64xf32> to vector<16x4xf32>
    %102 = vector.extract_strided_slice %100 {offsets = [0, 4], sizes = [16, 4], strides = [1, 1]} : vector<16x64xf32> to vector<16x4xf32>
    %103 = vector.extract_strided_slice %100 {offsets = [0, 8], sizes = [16, 4], strides = [1, 1]} : vector<16x64xf32> to vector<16x4xf32>
    %104 = vector.extract_strided_slice %100 {offsets = [0, 12], sizes = [16, 4], strides = [1, 1]} : vector<16x64xf32> to vector<16x4xf32>
    %105 = vector.extract_strided_slice %100 {offsets = [0, 16], sizes = [16, 4], strides = [1, 1]} : vector<16x64xf32> to vector<16x4xf32>
    %106 = vector.extract_strided_slice %100 {offsets = [0, 20], sizes = [16, 4], strides = [1, 1]} : vector<16x64xf32> to vector<16x4xf32>
    %107 = vector.extract_strided_slice %100 {offsets = [0, 24], sizes = [16, 4], strides = [1, 1]} : vector<16x64xf32> to vector<16x4xf32>
    %108 = vector.extract_strided_slice %100 {offsets = [0, 28], sizes = [16, 4], strides = [1, 1]} : vector<16x64xf32> to vector<16x4xf32>
    %109 = vector.extract_strided_slice %100 {offsets = [0, 32], sizes = [16, 4], strides = [1, 1]} : vector<16x64xf32> to vector<16x4xf32>
    %110 = vector.extract_strided_slice %100 {offsets = [0, 36], sizes = [16, 4], strides = [1, 1]} : vector<16x64xf32> to vector<16x4xf32>
    %111 = vector.extract_strided_slice %100 {offsets = [0, 40], sizes = [16, 4], strides = [1, 1]} : vector<16x64xf32> to vector<16x4xf32>
    %112 = vector.extract_strided_slice %100 {offsets = [0, 44], sizes = [16, 4], strides = [1, 1]} : vector<16x64xf32> to vector<16x4xf32>
    %113 = vector.extract_strided_slice %100 {offsets = [0, 48], sizes = [16, 4], strides = [1, 1]} : vector<16x64xf32> to vector<16x4xf32>
    %114 = vector.extract_strided_slice %100 {offsets = [0, 52], sizes = [16, 4], strides = [1, 1]} : vector<16x64xf32> to vector<16x4xf32>
    %115 = vector.extract_strided_slice %100 {offsets = [0, 56], sizes = [16, 4], strides = [1, 1]} : vector<16x64xf32> to vector<16x4xf32>
    %116 = vector.extract_strided_slice %100 {offsets = [0, 60], sizes = [16, 4], strides = [1, 1]} : vector<16x64xf32> to vector<16x4xf32>
    %117 = tpu.concatenate %101, %102, %103, %104, %105, %106, %107, %108, %109, %110, %111, %112, %113, %114, %115, %116 in 0 : vector<16x4xf32>, vector<16x4xf32>, vector<16x4xf32>, vector<16x4xf32>, vector<16x4xf32>, vector<16x4xf32>, vector<16x4xf32>, vector<16x4xf32>, vector<16x4xf32>, vector<16x4xf32>, vector<16x4xf32>, vector<16x4xf32>, vector<16x4xf32>, vector<16x4xf32>, vector<16x4xf32>, vector<16x4xf32> -> vector<256x4xf32>
    %c0_41 = arith.constant 0 : index
    %c0_42 = arith.constant 0 : index
    %118 = vector.load %arg14[%c0_41, %c0_42] : memref<32x256xf32, #tpu.memory_space<vmem>>, vector<32x256xf32>
    %cst_43 = arith.constant dense<0.000000e+00> : vector<32x4xf32>
    %119 = tpu.matmul %118, %117, %cst_43 {dimension_numbers = #tpu.dot_dimension_numbers<[1], [0], [0], [1], [0, 0, 1, 1], [], []>} : vector<32x256xf32>, vector<256x4xf32>, vector<32x4xf32> -> vector<32x4xf32>
    %c0_44 = arith.constant 0 : index
    %c0_45 = arith.constant 0 : index
    %120 = vector.load %arg15[%c0_44, %c0_45] : memref<32x1xf32, #tpu.memory_space<vmem>>, vector<32x1xf32>
    %121 = vector.broadcast %120 : vector<32x1xf32> to vector<32x4xf32>
    %122 = arith.addf %119, %121 : vector<32x4xf32>
    %cst_46 = arith.constant 0.000000e+00 : f32
    %123 = vector.broadcast %cst_46 : f32 to vector<32x4xf32>
    %124 = arith.cmpf oge, %122, %123 : vector<32x4xf32>
    %cst_47 = arith.constant 2.000000e-01 : f32
    %125 = vector.broadcast %cst_47 : f32 to vector<32x4xf32>
    %126 = arith.mulf %125, %122 : vector<32x4xf32>
    %127 = arith.select %124, %122, %126 : vector<32x4xi1>, vector<32x4xf32>
    %c0_48 = arith.constant 0 : index
    %c0_49 = arith.constant 0 : index
    %128 = vector.load %arg16[%c0_48, %c0_49] : memref<2x32xf32, #tpu.memory_space<vmem>>, vector<2x32xf32>
    %cst_50 = arith.constant dense<0.000000e+00> : vector<2x4xf32>
    %129 = tpu.matmul %128, %127, %cst_50 {dimension_numbers = #tpu.dot_dimension_numbers<[1], [0], [0], [1], [0, 0, 1, 1], [], []>} : vector<2x32xf32>, vector<32x4xf32>, vector<2x4xf32> -> vector<2x4xf32>
    %c0_51 = arith.constant 0 : index
    %c0_52 = arith.constant 0 : index
    %130 = vector.load %arg17[%c0_51, %c0_52] : memref<1x1xf32, #tpu.memory_space<vmem>>, vector<1x1xf32>
    %131 = vector.broadcast %130 : vector<1x1xf32> to vector<2x4xf32>
    %132 = arith.addf %129, %131 : vector<2x4xf32>
    %c0_53 = arith.constant 0 : index
    %c0_54 = arith.constant 0 : index
    %133 = vector.load %arg5[%c0_53, %c0_54] : memref<16x4xf32, #tpu.memory_space<vmem>>, vector<16x4xf32>
    %cst_55 = arith.constant dense<0.000000e+00> : vector<2x4xf32>
    %134 = tpu.matmul %65, %133, %cst_55 {dimension_numbers = #tpu.dot_dimension_numbers<[1], [0], [0], [1], [0, 0, 1, 1], [], []>} : vector<2x16xf32>, vector<16x4xf32>, vector<2x4xf32> -> vector<2x4xf32>
    %135 = arith.addf %134, %132 : vector<2x4xf32>
    %cst_56 = arith.constant 5.000000e-01 : f32
    %136 = vector.broadcast %cst_56 : f32 to vector<2x4xf32>
    %137 = arith.mulf %135, %136 : vector<2x4xf32>
    %cst_57 = arith.constant 0.000000e+00 : f32
    %138 = vector.broadcast %cst_57 : f32 to vector<2x4xf32>
    %139 = arith.subf %138, %137 : vector<2x4xf32>
    %140 = math.exp %139 : vector<2x4xf32>
    %cst_58 = arith.constant 1.000000e+00 : f32
    %141 = vector.broadcast %cst_58 : f32 to vector<2x4xf32>
    %142 = arith.addf %141, %140 : vector<2x4xf32>
    %cst_59 = arith.constant 1.000000e+00 : f32
    %143 = vector.broadcast %cst_59 : f32 to vector<2x4xf32>
    %144 = arith.divf %143, %142 : vector<2x4xf32>
    %c0_60 = arith.constant 0 : index
    %c0_61 = arith.constant 0 : index
    %145 = vector.load %arg18[%c0_60, %c0_61] : memref<2x4xf32, #tpu.memory_space<vmem>>, vector<2x4xf32>
    tpu.vector_store %arg18[%c0_60, %c0_61], %144 {strides = array<i32>} : memref<2x4xf32, #tpu.memory_space<vmem>>, vector<2x4xf32>,
    return
  }
}

</mosaic_0001>

<llo_original>
// kernel: ms_image_dis_forward.1
$region0: #{ms_image_dis_forward.1}
  #allocation0 [shape = 'u32[]', space=smem, size = 0x4, offset = 0x4, fixed_abs, tag = 'smem constant byte address 0x4 - core index']
  #allocation1 [shape = 'u32[72,128]{1,0:T(1,128)}', space=vmem, size = 0x9000, scoped, tag = 'internal scratch']
  #allocation2 [shape = 'f32[1,1]{1,0:T(1,128)S(1)}', space=vmem, size = 0x200, scoped, tag = 'scoped memory for ms_image_dis_forward.1']
  #allocation3 [shape = 'f32[1,1]{1,0:T(1,128)S(1)}', space=vmem, size = 0x200, scoped, tag = 'scoped memory for ms_image_dis_forward.1']
  %s0 = inlined_call_operand.vmem [shape: f32[8,256], index: 0, kind: input, shape index: {}]
  %s1 = inlined_call_operand.vmem [shape: bf16[256,1024], index: 1, kind: input, shape index: {}]
  %s2 = inlined_call_operand.vmem [shape: bf16[64,256], index: 2, kind: input, shape index: {}]
  %s3 = inlined_call_operand.vmem [shape: bf16[16,64], index: 3, kind: input, shape index: {}]
  %s4 = inlined_call_operand.vmem [shape: f32[256,64], index: 4, kind: input, shape index: {}]
  %s5 = inlined_call_operand.vmem [shape: f32[16,4], index: 5, kind: input, shape index: {}]
  %s6 = inlined_call_operand.vmem [shape: f32[16,128], index: 6, kind: input, shape index: {}]
  %s7 = inlined_call_operand.vmem [shape: f32[16,1], index: 7, kind: input, shape index: {}]
  %s8 = inlined_call_operand.vmem [shape: f32[32,256], index: 8, kind: input, shape index: {}]
  %s9 = inlined_call_operand.vmem [shape: f32[32,1], index: 9, kind: input, shape index: {}]
  %s10 = inlined_call_operand.vmem [shape: f32[2,32], index: 10, kind: input, shape index: {}]
  %s11 = inlined_call_operand.<no memory space> [shape: f32[1,1], index: 11, kind: input, shape index: {}]
  %s12 = inlined_call_operand.vmem [shape: f32[16,128], index: 12, kind: input, shape index: {}]
  %s13 = inlined_call_operand.vmem [shape: f32[16,1], index: 13, kind: input, shape index: {}]
  %s14 = inlined_call_operand.vmem [shape: f32[32,256], index: 14, kind: input, shape index: {}]
  %s15 = inlined_call_operand.vmem [shape: f32[32,1], index: 15, kind: input, shape index: {}]
  %s16 = inlined_call_operand.vmem [shape: f32[2,32], index: 16, kind: input, shape index: {}]
  %s17 = inlined_call_operand.<no memory space> [shape: f32[1,1], index: 17, kind: input, shape index: {}]
  %s18 = inlined_call_operand.vmem [shape: f32[2,4], index: 18, kind: output, shape index: {}]
  %s19 = sld [smem:[#allocation0]]
  $region82: #{ms_image_dis_forward.1} parent=0
    _
  %s21 = ssub.s32 1, %s19
  %s22 = scalar_select 0, %s21, %s19
  %v23 = vstv %s11
  %24 = vst [vmem:[#allocation2] sm:$0x1] %v23
  %v25 = vstv %s17
  %26 = vst [vmem:[#allocation3] sm:$0x1] %v25
  // Predicated region
  $region2: #{ms_image_dis_forward.1} parent=0 // pred_check
    _
  $region3: #{ms_image_dis_forward.1} parent=0 // pred_check_branch
    %28 = sbr.rel (0) target = $region5
  $region4: #{ms_image_dis_forward.1} parent=0 // pred_region
    _
  $region5: #{ms_image_dis_forward.1} parent=0 // pred_fallthru
    _
  // Predicated region
  $region6: #{ms_image_dis_forward.1} parent=0 // pred_check
    _
  $region7: #{ms_image_dis_forward.1} parent=0 // pred_check_branch
    %30 = sbr.rel (0) target = $region9
  $region8: #{ms_image_dis_forward.1} parent=0 // pred_region
    _
  $region9: #{ms_image_dis_forward.1} parent=0 // pred_fallthru
    _
  // Predicated region
  $region10: #{ms_image_dis_forward.1} parent=0 // pred_check
    _
  $region11: #{ms_image_dis_forward.1} parent=0 // pred_check_branch
    %32 = sbr.rel (0) target = $region13
  $region12: #{ms_image_dis_forward.1} parent=0 // pred_region
    _
  $region13: #{ms_image_dis_forward.1} parent=0 // pred_fallthru
    _
  // Predicated region
  $region14: #{ms_image_dis_forward.1} parent=0 // pred_check
    _
  $region15: #{ms_image_dis_forward.1} parent=0 // pred_check_branch
    %34 = sbr.rel (0) target = $region17
  $region16: #{ms_image_dis_forward.1} parent=0 // pred_region
    _
  $region17: #{ms_image_dis_forward.1} parent=0 // pred_fallthru
    _
  // Predicated region
  $region18: #{ms_image_dis_forward.1} parent=0 // pred_check
    _
  $region19: #{ms_image_dis_forward.1} parent=0 // pred_check_branch
    %36 = sbr.rel (0) target = $region21
  $region20: #{ms_image_dis_forward.1} parent=0 // pred_region
    _
  $region21: #{ms_image_dis_forward.1} parent=0 // pred_fallthru
    _
  // Predicated region
  $region22: #{ms_image_dis_forward.1} parent=0 // pred_check
    _
  $region23: #{ms_image_dis_forward.1} parent=0 // pred_check_branch
    %38 = sbr.rel (0) target = $region25
  $region24: #{ms_image_dis_forward.1} parent=0 // pred_region
    _
  $region25: #{ms_image_dis_forward.1} parent=0 // pred_fallthru
    _
  // Predicated region
  $region26: #{ms_image_dis_forward.1} parent=0 // pred_check
    _
  $region27: #{ms_image_dis_forward.1} parent=0 // pred_check_branch
    %40 = sbr.rel (0) target = $region29
  $region28: #{ms_image_dis_forward.1} parent=0 // pred_region
    _
  $region29: #{ms_image_dis_forward.1} parent=0 // pred_fallthru
    _
  // Predicated region
  $region30: #{ms_image_dis_forward.1} parent=0 // pred_check
    _
  $region31: #{ms_image_dis_forward.1} parent=0 // pred_check_branch
    %42 = sbr.rel (0) target = $region33
  $region32: #{ms_image_dis_forward.1} parent=0 // pred_region
    _
  $region33: #{ms_image_dis_forward.1} parent=0 // pred_fallthru
    _
  // Predicated region
  $region34: #{ms_image_dis_forward.1} parent=0 // pred_check
    _
  $region35: #{ms_image_dis_forward.1} parent=0 // pred_check_branch
    %44 = sbr.rel (0) target = $region37
  $region36: #{ms_image_dis_forward.1} parent=0 // pred_region
    _
  $region37: #{ms_image_dis_forward.1} parent=0 // pred_fallthru
    _
  // Predicated region
  $region38: #{ms_image_dis_forward.1} parent=0 // pred_check
    _
  $region39: #{ms_image_dis_forward.1} parent=0 // pred_check_branch
    %46 = sbr.rel (0) target = $region41
  $region40: #{ms_image_dis_forward.1} parent=0 // pred_region
    _
  $region41: #{ms_image_dis_forward.1} parent=0 // pred_fallthru
    _
  // Predicated region
  $region42: #{ms_image_dis_forward.1} parent=0 // pred_check
    _
  $region43: #{ms_image_dis_forward.1} parent=0 // pred_check_branch
    %48 = sbr.rel (0) target = $region45
  $region44: #{ms_image_dis_forward.1} parent=0 // pred_region
    _
  $region45: #{ms_image_dis_forward.1} parent=0 // pred_fallthru
    _
  // Predicated region
  $region46: #{ms_image_dis_forward.1} parent=0 // pred_check
    _
  $region47: #{ms_image_dis_forward.1} parent=0 // pred_check_branch
    %50 = sbr.rel (0) target = $region49
  $region48: #{ms_image_dis_forward.1} parent=0 // pred_region
    _
  $region49: #{ms_image_dis_forward.1} parent=0 // pred_fallthru
    _
  // Predicated region
  $region50: #{ms_image_dis_forward.1} parent=0 // pred_check
    _
  $region51: #{ms_image_dis_forward.1} parent=0 // pred_check_branch
    %52 = sbr.rel (0) target = $region53
  $region52: #{ms_image_dis_forward.1} parent=0 // pred_region
    _
  $region53: #{ms_image_dis_forward.1} parent=0 // pred_fallthru
    _
  // Predicated region
  $region54: #{ms_image_dis_forward.1} parent=0 // pred_check
    _
  $region55: #{ms_image_dis_forward.1} parent=0 // pred_check_branch
    %54 = sbr.rel (0) target = $region57
  $region56: #{ms_image_dis_forward.1} parent=0 // pred_region
    _
  $region57: #{ms_image_dis_forward.1} parent=0 // pred_fallthru
    _
  // Predicated region
  $region58: #{ms_image_dis_forward.1} parent=0 // pred_check
    _
  $region59: #{ms_image_dis_forward.1} parent=0 // pred_check_branch
    %56 = sbr.rel (0) target = $region61
  $region60: #{ms_image_dis_forward.1} parent=0 // pred_region
    _
  $region61: #{ms_image_dis_forward.1} parent=0 // pred_fallthru
    _
  // Predicated region
  $region62: #{ms_image_dis_forward.1} parent=0 // pred_check
    _
  $region63: #{ms_image_dis_forward.1} parent=0 // pred_check_branch
    %58 = sbr.rel (0) target = $region65
  $region64: #{ms_image_dis_forward.1} parent=0 // pred_region
    _
  $region65: #{ms_image_dis_forward.1} parent=0 // pred_fallthru
    _
  // Predicated region
  $region66: #{ms_image_dis_forward.1} parent=0 // pred_check
    _
  $region67: #{ms_image_dis_forward.1} parent=0 // pred_check_branch
    %60 = sbr.rel (0) target = $region69
  $region68: #{ms_image_dis_forward.1} parent=0 // pred_region
    _
  $region69: #{ms_image_dis_forward.1} parent=0 // pred_fallthru
    _
  // Predicated region
  $region70: #{ms_image_dis_forward.1} parent=0 // pred_check
    _
  $region71: #{ms_image_dis_forward.1} parent=0 // pred_check_branch
    %62 = sbr.rel (0) target = $region73
  $region72: #{ms_image_dis_forward.1} parent=0 // pred_region
    _
  $region73: #{ms_image_dis_forward.1} parent=0 // pred_fallthru
    _
  %v63 = vld [vmem:[%s0] sm:$0xff]
  %v64 = vld [vmem:[%s0 + $0x8] sm:$0xff]
  %v65 = vld [vmem:[%s1] sm:$0xff]
  %v66 = vld [vmem:[%s1 + $0x8] sm:$0xff]
  %v67 = vld [vmem:[%s1 + $0x10] sm:$0xff]
  %v68 = vld [vmem:[%s1 + $0x18] sm:$0xff]
  %v69 = vld [vmem:[%s1 + $0x20] sm:$0xff]
  %v70 = vld [vmem:[%s1 + $0x28] sm:$0xff]
  %v71 = vld [vmem:[%s1 + $0x30] sm:$0xff]
  %v72 = vld [vmem:[%s1 + $0x38] sm:$0xff]
  %v73 = vld [vmem:[%s1 + $0x40] sm:$0xff]
  %v74 = vld [vmem:[%s1 + $0x48] sm:$0xff]
  %v75 = vld [vmem:[%s1 + $0x50] sm:$0xff]
  %v76 = vld [vmem:[%s1 + $0x58] sm:$0xff]
  %v77 = vld [vmem:[%s1 + $0x60] sm:$0xff]
  %v78 = vld [vmem:[%s1 + $0x68] sm:$0xff]
  %v79 = vld [vmem:[%s1 + $0x70] sm:$0xff]
  %v80 = vld [vmem:[%s1 + $0x78] sm:$0xff]
  %v81 = vld [vmem:[%s1 + $0x80] sm:$0xff]
  %v82 = vld [vmem:[%s1 + $0x88] sm:$0xff]
  %v83 = vld [vmem:[%s1 + $0x90] sm:$0xff]
  %v84 = vld [vmem:[%s1 + $0x98] sm:$0xff]
  %v85 = vld [vmem:[%s1 + $0xa0] sm:$0xff]
  %v86 = vld [vmem:[%s1 + $0xa8] sm:$0xff]
  %v87 = vld [vmem:[%s1 + $0xb0] sm:$0xff]
  %v88 = vld [vmem:[%s1 + $0xb8] sm:$0xff]
  %v89 = vld [vmem:[%s1 + $0xc0] sm:$0xff]
  %v90 = vld [vmem:[%s1 + $0xc8] sm:$0xff]
  %v91 = vld [vmem:[%s1 + $0xd0] sm:$0xff]
  %v92 = vld [vmem:[%s1 + $0xd8] sm:$0xff]
  %v93 = vld [vmem:[%s1 + $0xe0] sm:$0xff]
  %v94 = vld [vmem:[%s1 + $0xe8] sm:$0xff]
  %v95 = vld [vmem:[%s1 + $0xf0] sm:$0xff]
  %v96 = vld [vmem:[%s1 + $0xf8] sm:$0xff]
  %v97 = vld [vmem:[%s1 + $0x100] sm:$0xff]
  %v98 = vld [vmem:[%s1 + $0x108] sm:$0xff]
  %v99 = vld [vmem:[%s1 + $0x110] sm:$0xff]
  %v100 = vld [vmem:[%s1 + $0x118] sm:$0xff]
  %v101 = vld [vmem:[%s1 + $0x120] sm:$0xff]
  %v102 = vld [vmem:[%s1 + $0x128] sm:$0xff]
  %v103 = vld [vmem:[%s1 + $0x130] sm:$0xff]
  %v104 = vld [vmem:[%s1 + $0x138] sm:$0xff]
  %v105 = vld [vmem:[%s1 + $0x140] sm:$0xff]
  %v106 = vld [vmem:[%s1 + $0x148] sm:$0xff]
  %v107 = vld [vmem:[%s1 + $0x150] sm:$0xff]
  %v108 = vld [vmem:[%s1 + $0x158] sm:$0xff]
  %v109 = vld [vmem:[%s1 + $0x160] sm:$0xff]
  %v110 = vld [vmem:[%s1 + $0x168] sm:$0xff]
  %v111 = vld [vmem:[%s1 + $0x170] sm:$0xff]
  %v112 = vld [vmem:[%s1 + $0x178] sm:$0xff]
  %v113 = vld [vmem:[%s1 + $0x180] sm:$0xff]
  %v114 = vld [vmem:[%s1 + $0x188] sm:$0xff]
  %v115 = vld [vmem:[%s1 + $0x190] sm:$0xff]
  %v116 = vld [vmem:[%s1 + $0x198] sm:$0xff]
  %v117 = vld [vmem:[%s1 + $0x1a0] sm:$0xff]
  %v118 = vld [vmem:[%s1 + $0x1a8] sm:$0xff]
  %v119 = vld [vmem:[%s1 + $0x1b0] sm:$0xff]
  %v120 = vld [vmem:[%s1 + $0x1b8] sm:$0xff]
  %v121 = vld [vmem:[%s1 + $0x1c0] sm:$0xff]
  %v122 = vld [vmem:[%s1 + $0x1c8] sm:$0xff]
  %v123 = vld [vmem:[%s1 + $0x1d0] sm:$0xff]
  %v124 = vld [vmem:[%s1 + $0x1d8] sm:$0xff]
  %v125 = vld [vmem:[%s1 + $0x1e0] sm:$0xff]
  %v126 = vld [vmem:[%s1 + $0x1e8] sm:$0xff]
  %v127 = vld [vmem:[%s1 + $0x1f0] sm:$0xff]
  %v128 = vld [vmem:[%s1 + $0x1f8] sm:$0xff]
  %v129 = vld [vmem:[%s1 + $0x200] sm:$0xff]
  %v130 = vld [vmem:[%s1 + $0x208] sm:$0xff]
  %v131 = vld [vmem:[%s1 + $0x210] sm:$0xff]
  %v132 = vld [vmem:[%s1 + $0x218] sm:$0xff]
  %v133 = vld [vmem:[%s1 + $0x220] sm:$0xff]
  %v134 = vld [vmem:[%s1 + $0x228] sm:$0xff]
  %v135 = vld [vmem:[%s1 + $0x230] sm:$0xff]
  %v136 = vld [vmem:[%s1 + $0x238] sm:$0xff]
  %v137 = vld [vmem:[%s1 + $0x240] sm:$0xff]
  %v138 = vld [vmem:[%s1 + $0x248] sm:$0xff]
  %v139 = vld [vmem:[%s1 + $0x250] sm:$0xff]
  %v140 = vld [vmem:[%s1 + $0x258] sm:$0xff]
  %v141 = vld [vmem:[%s1 + $0x260] sm:$0xff]
  %v142 = vld [vmem:[%s1 + $0x268] sm:$0xff]
  %v143 = vld [vmem:[%s1 + $0x270] sm:$0xff]
  %v144 = vld [vmem:[%s1 + $0x278] sm:$0xff]
  %v145 = vld [vmem:[%s1 + $0x280] sm:$0xff]
  %v146 = vld [vmem:[%s1 + $0x288] sm:$0xff]
  %v147 = vld [vmem:[%s1 + $0x290] sm:$0xff]
  %v148 = vld [vmem:[%s1 + $0x298] sm:$0xff]
  %v149 = vld [vmem:[%s1 + $0x2a0] sm:$0xff]
  %v150 = vld [vmem:[%s1 + $0x2a8] sm:$0xff]
  %v151 = vld [vmem:[%s1 + $0x2b0] sm:$0xff]
  %v152 = vld [vmem:[%s1 + $0x2b8] sm:$0xff]
  %v153 = vld [vmem:[%s1 + $0x2c0] sm:$0xff]
  %v154 = vld [vmem:[%s1 + $0x2c8] sm:$0xff]
  %v155 = vld [vmem:[%s1 + $0x2d0] sm:$0xff]
  %v156 = vld [vmem:[%s1 + $0x2d8] sm:$0xff]
  %v157 = vld [vmem:[%s1 + $0x2e0] sm:$0xff]
  %v158 = vld [vmem:[%s1 + $0x2e8] sm:$0xff]
  %v159 = vld [vmem:[%s1 + $0x2f0] sm:$0xff]
  %v160 = vld [vmem:[%s1 + $0x2f8] sm:$0xff]
  %v161 = vld [vmem:[%s1 + $0x300] sm:$0xff]
  %v162 = vld [vmem:[%s1 + $0x308] sm:$0xff]
  %v163 = vld [vmem:[%s1 + $0x310] sm:$0xff]
  %v164 = vld [vmem:[%s1 + $0x318] sm:$0xff]
  %v165 = vld [vmem:[%s1 + $0x320] sm:$0xff]
  %v166 = vld [vmem:[%s1 + $0x328] sm:$0xff]
  %v167 = vld [vmem:[%s1 + $0x330] sm:$0xff]
  %v168 = vld [vmem:[%s1 + $0x338] sm:$0xff]
  %v169 = vld [vmem:[%s1 + $0x340] sm:$0xff]
  %v170 = vld [vmem:[%s1 + $0x348] sm:$0xff]
  %v171 = vld [vmem:[%s1 + $0x350] sm:$0xff]
  %v172 = vld [vmem:[%s1 + $0x358] sm:$0xff]
  %v173 = vld [vmem:[%s1 + $0x360] sm:$0xff]
  %v174 = vld [vmem:[%s1 + $0x368] sm:$0xff]
  %v175 = vld [vmem:[%s1 + $0x370] sm:$0xff]
  %v176 = vld [vmem:[%s1 + $0x378] sm:$0xff]
  %v177 = vld [vmem:[%s1 + $0x380] sm:$0xff]
  %v178 = vld [vmem:[%s1 + $0x388] sm:$0xff]
  %v179 = vld [vmem:[%s1 + $0x390] sm:$0xff]
  %v180 = vld [vmem:[%s1 + $0x398] sm:$0xff]
  %v181 = vld [vmem:[%s1 + $0x3a0] sm:$0xff]
  %v182 = vld [vmem:[%s1 + $0x3a8] sm:$0xff]
  %v183 = vld [vmem:[%s1 + $0x3b0] sm:$0xff]
  %v184 = vld [vmem:[%s1 + $0x3b8] sm:$0xff]
  %v185 = vld [vmem:[%s1 + $0x3c0] sm:$0xff]
  %v186 = vld [vmem:[%s1 + $0x3c8] sm:$0xff]
  %v187 = vld [vmem:[%s1 + $0x3d0] sm:$0xff]
  %v188 = vld [vmem:[%s1 + $0x3d8] sm:$0xff]
  %v189 = vld [vmem:[%s1 + $0x3e0] sm:$0xff]
  %v190 = vld [vmem:[%s1 + $0x3e8] sm:$0xff]
  %v191 = vld [vmem:[%s1 + $0x3f0] sm:$0xff]
  %v192 = vld [vmem:[%s1 + $0x3f8] sm:$0xff]
  %v193 = vunpack.c.l.bf16 %v65
  %v194 = vunpack.c.h.bf16 %v65
  %v195 = vunpack.c.l.bf16 %v66
  %v196 = vunpack.c.h.bf16 %v66
  %v197 = vunpack.c.l.bf16 %v67
  %v198 = vunpack.c.h.bf16 %v67
  %v199 = vunpack.c.l.bf16 %v68
  %v200 = vunpack.c.h.bf16 %v68
  %v201 = vunpack.c.l.bf16 %v69
  %v202 = vunpack.c.h.bf16 %v69
  %v203 = vunpack.c.l.bf16 %v70
  %v204 = vunpack.c.h.bf16 %v70
  %v205 = vunpack.c.l.bf16 %v71
  %v206 = vunpack.c.h.bf16 %v71
  %v207 = vunpack.c.l.bf16 %v72
  %v208 = vunpack.c.h.bf16 %v72
  %v209 = vunpack.c.l.bf16 %v73
  %v210 = vunpack.c.h.bf16 %v73
  %v211 = vunpack.c.l.bf16 %v74
  %v212 = vunpack.c.h.bf16 %v74
  %v213 = vunpack.c.l.bf16 %v75
  %v214 = vunpack.c.h.bf16 %v75
  %v215 = vunpack.c.l.bf16 %v76
  %v216 = vunpack.c.h.bf16 %v76
  %v217 = vunpack.c.l.bf16 %v77
  %v218 = vunpack.c.h.bf16 %v77
  %v219 = vunpack.c.l.bf16 %v78
  %v220 = vunpack.c.h.bf16 %v78
  %v221 = vunpack.c.l.bf16 %v79
  %v222 = vunpack.c.h.bf16 %v79
  %v223 = vunpack.c.l.bf16 %v80
  %v224 = vunpack.c.h.bf16 %v80
  %v225 = vunpack.c.l.bf16 %v81
  %v226 = vunpack.c.h.bf16 %v81
  %v227 = vunpack.c.l.bf16 %v82
  %v228 = vunpack.c.h.bf16 %v82
  %v229 = vunpack.c.l.bf16 %v83
  %v230 = vunpack.c.h.bf16 %v83
  %v231 = vunpack.c.l.bf16 %v84
  %v232 = vunpack.c.h.bf16 %v84
  %v233 = vunpack.c.l.bf16 %v85
  %v234 = vunpack.c.h.bf16 %v85
  %v235 = vunpack.c.l.bf16 %v86
  %v236 = vunpack.c.h.bf16 %v86
  %v237 = vunpack.c.l.bf16 %v87
  %v238 = vunpack.c.h.bf16 %v87
  %v239 = vunpack.c.l.bf16 %v88
  %v240 = vunpack.c.h.bf16 %v88
  %v241 = vunpack.c.l.bf16 %v89
  %v242 = vunpack.c.h.bf16 %v89
  %v243 = vunpack.c.l.bf16 %v90
  %v244 = vunpack.c.h.bf16 %v90
  %v245 = vunpack.c.l.bf16 %v91
  %v246 = vunpack.c.h.bf16 %v91
  %v247 = vunpack.c.l.bf16 %v92
  %v248 = vunpack.c.h.bf16 %v92
  %v249 = vunpack.c.l.bf16 %v93
  %v250 = vunpack.c.h.bf16 %v93
  %v251 = vunpack.c.l.bf16 %v94
  %v252 = vunpack.c.h.bf16 %v94
  %v253 = vunpack.c.l.bf16 %v95
  %v254 = vunpack.c.h.bf16 %v95
  %v255 = vunpack.c.l.bf16 %v96
  %v256 = vunpack.c.h.bf16 %v96
  %v257 = vunpack.c.l.bf16 %v97
  %v258 = vunpack.c.h.bf16 %v97
  %v259 = vunpack.c.l.bf16 %v98
  %v260 = vunpack.c.h.bf16 %v98
  %v261 = vunpack.c.l.bf16 %v99
  %v262 = vunpack.c.h.bf16 %v99
  %v263 = vunpack.c.l.bf16 %v100
  %v264 = vunpack.c.h.bf16 %v100
  %v265 = vunpack.c.l.bf16 %v101
  %v266 = vunpack.c.h.bf16 %v101
  %v267 = vunpack.c.l.bf16 %v102
  %v268 = vunpack.c.h.bf16 %v102
  %v269 = vunpack.c.l.bf16 %v103
  %v270 = vunpack.c.h.bf16 %v103
  %v271 = vunpack.c.l.bf16 %v104
  %v272 = vunpack.c.h.bf16 %v104
  %v273 = vunpack.c.l.bf16 %v105
  %v274 = vunpack.c.h.bf16 %v105
  %v275 = vunpack.c.l.bf16 %v106
  %v276 = vunpack.c.h.bf16 %v106
  %v277 = vunpack.c.l.bf16 %v107
  %v278 = vunpack.c.h.bf16 %v107
  %v279 = vunpack.c.l.bf16 %v108
  %v280 = vunpack.c.h.bf16 %v108
  %v281 = vunpack.c.l.bf16 %v109
  %v282 = vunpack.c.h.bf16 %v109
  %v283 = vunpack.c.l.bf16 %v110
  %v284 = vunpack.c.h.bf16 %v110
  %v285 = vunpack.c.l.bf16 %v111
  %v286 = vunpack.c.h.bf16 %v111
  %v287 = vunpack.c.l.bf16 %v112
  %v288 = vunpack.c.h.bf16 %v112
  %v289 = vunpack.c.l.bf16 %v113
  %v290 = vunpack.c.h.bf16 %v113
  %v291 = vunpack.c.l.bf16 %v114
  %v292 = vunpack.c.h.bf16 %v114
  %v293 = vunpack.c.l.bf16 %v115
  %v294 = vunpack.c.h.bf16 %v115
  %v295 = vunpack.c.l.bf16 %v116
  %v296 = vunpack.c.h.bf16 %v116
  %v297 = vunpack.c.l.bf16 %v117
  %v298 = vunpack.c.h.bf16 %v117
  %v299 = vunpack.c.l.bf16 %v118
  %v300 = vunpack.c.h.bf16 %v118
  %v301 = vunpack.c.l.bf16 %v119
  %v302 = vunpack.c.h.bf16 %v119
  %v303 = vunpack.c.l.bf16 %v120
  %v304 = vunpack.c.h.bf16 %v120
  %v305 = vunpack.c.l.bf16 %v121
  %v306 = vunpack.c.h.bf16 %v121
  %v307 = vunpack.c.l.bf16 %v122
  %v308 = vunpack.c.h.bf16 %v122
  %v309 = vunpack.c.l.bf16 %v123
  %v310 = vunpack.c.h.bf16 %v123
  %v311 = vunpack.c.l.bf16 %v124
  %v312 = vunpack.c.h.bf16 %v124
  %v313 = vunpack.c.l.bf16 %v125
  %v314 = vunpack.c.h.bf16 %v125
  %v315 = vunpack.c.l.bf16 %v126
  %v316 = vunpack.c.h.bf16 %v126
  %v317 = vunpack.c.l.bf16 %v127
  %v318 = vunpack.c.h.bf16 %v127
  %v319 = vunpack.c.l.bf16 %v128
  %v320 = vunpack.c.h.bf16 %v128
  %v321 = vunpack.c.l.bf16 %v129
  %v322 = vunpack.c.h.bf16 %v129
  %v323 = vunpack.c.l.bf16 %v130
  %v324 = vunpack.c.h.bf16 %v130
  %v325 = vunpack.c.l.bf16 %v131
  %v326 = vunpack.c.h.bf16 %v131
  %v327 = vunpack.c.l.bf16 %v132
  %v328 = vunpack.c.h.bf16 %v132
  %v329 = vunpack.c.l.bf16 %v133
  %v330 = vunpack.c.h.bf16 %v133
  %v331 = vunpack.c.l.bf16 %v134
  %v332 = vunpack.c.h.bf16 %v134
  %v333 = vunpack.c.l.bf16 %v135
  %v334 = vunpack.c.h.bf16 %v135
  %v335 = vunpack.c.l.bf16 %v136
  %v336 = vunpack.c.h.bf16 %v136
  %v337 = vunpack.c.l.bf16 %v137
  %v338 = vunpack.c.h.bf16 %v137
  %v339 = vunpack.c.l.bf16 %v138
  %v340 = vunpack.c.h.bf16 %v138
  %v341 = vunpack.c.l.bf16 %v139
  %v342 = vunpack.c.h.bf16 %v139
  %v343 = vunpack.c.l.bf16 %v140
  %v344 = vunpack.c.h.bf16 %v140
  %v345 = vunpack.c.l.bf16 %v141
  %v346 = vunpack.c.h.bf16 %v141
  %v347 = vunpack.c.l.bf16 %v142
  %v348 = vunpack.c.h.bf16 %v142
  %v349 = vunpack.c.l.bf16 %v143
  %v350 = vunpack.c.h.bf16 %v143
  %v351 = vunpack.c.l.bf16 %v144
  %v352 = vunpack.c.h.bf16 %v144
  %v353 = vunpack.c.l.bf16 %v145
  %v354 = vunpack.c.h.bf16 %v145
  %v355 = vunpack.c.l.bf16 %v146
  %v356 = vunpack.c.h.bf16 %v146
  %v357 = vunpack.c.l.bf16 %v147
  %v358 = vunpack.c.h.bf16 %v147
  %v359 = vunpack.c.l.bf16 %v148
  %v360 = vunpack.c.h.bf16 %v148
  %v361 = vunpack.c.l.bf16 %v149
  %v362 = vunpack.c.h.bf16 %v149
  %v363 = vunpack.c.l.bf16 %v150
  %v364 = vunpack.c.h.bf16 %v150
  %v365 = vunpack.c.l.bf16 %v151
  %v366 = vunpack.c.h.bf16 %v151
  %v367 = vunpack.c.l.bf16 %v152
  %v368 = vunpack.c.h.bf16 %v152
  %v369 = vunpack.c.l.bf16 %v153
  %v370 = vunpack.c.h.bf16 %v153
  %v371 = vunpack.c.l.bf16 %v154
  %v372 = vunpack.c.h.bf16 %v154
  %v373 = vunpack.c.l.bf16 %v155
  %v374 = vunpack.c.h.bf16 %v155
  %v375 = vunpack.c.l.bf16 %v156
  %v376 = vunpack.c.h.bf16 %v156
  %v377 = vunpack.c.l.bf16 %v157
  %v378 = vunpack.c.h.bf16 %v157
  %v379 = vunpack.c.l.bf16 %v158
  %v380 = vunpack.c.h.bf16 %v158
  %v381 = vunpack.c.l.bf16 %v159
  %v382 = vunpack.c.h.bf16 %v159
  %v383 = vunpack.c.l.bf16 %v160
  %v384 = vunpack.c.h.bf16 %v160
  %v385 = vunpack.c.l.bf16 %v161
  %v386 = vunpack.c.h.bf16 %v161
  %v387 = vunpack.c.l.bf16 %v162
  %v388 = vunpack.c.h.bf16 %v162
  %v389 = vunpack.c.l.bf16 %v163
  %v390 = vunpack.c.h.bf16 %v163
  %v391 = vunpack.c.l.bf16 %v164
  %v392 = vunpack.c.h.bf16 %v164
  %v393 = vunpack.c.l.bf16 %v165
  %v394 = vunpack.c.h.bf16 %v165
  %v395 = vunpack.c.l.bf16 %v166
  %v396 = vunpack.c.h.bf16 %v166
  %v397 = vunpack.c.l.bf16 %v167
  %v398 = vunpack.c.h.bf16 %v167
  %v399 = vunpack.c.l.bf16 %v168
  %v400 = vunpack.c.h.bf16 %v168
  %v401 = vunpack.c.l.bf16 %v169
  %v402 = vunpack.c.h.bf16 %v169
  %v403 = vunpack.c.l.bf16 %v170
  %v404 = vunpack.c.h.bf16 %v170
  %v405 = vunpack.c.l.bf16 %v171
  %v406 = vunpack.c.h.bf16 %v171
  %v407 = vunpack.c.l.bf16 %v172
  %v408 = vunpack.c.h.bf16 %v172
  %v409 = vunpack.c.l.bf16 %v173
  %v410 = vunpack.c.h.bf16 %v173
  %v411 = vunpack.c.l.bf16 %v174
  %v412 = vunpack.c.h.bf16 %v174
  %v413 = vunpack.c.l.bf16 %v175
  %v414 = vunpack.c.h.bf16 %v175
  %v415 = vunpack.c.l.bf16 %v176
  %v416 = vunpack.c.h.bf16 %v176
  %v417 = vunpack.c.l.bf16 %v177
  %v418 = vunpack.c.h.bf16 %v177
  %v419 = vunpack.c.l.bf16 %v178
  %v420 = vunpack.c.h.bf16 %v178
  %v421 = vunpack.c.l.bf16 %v179
  %v422 = vunpack.c.h.bf16 %v179
  %v423 = vunpack.c.l.bf16 %v180
  %v424 = vunpack.c.h.bf16 %v180
  %v425 = vunpack.c.l.bf16 %v181
  %v426 = vunpack.c.h.bf16 %v181
  %v427 = vunpack.c.l.bf16 %v182
  %v428 = vunpack.c.h.bf16 %v182
  %v429 = vunpack.c.l.bf16 %v183
  %v430 = vunpack.c.h.bf16 %v183
  %v431 = vunpack.c.l.bf16 %v184
  %v432 = vunpack.c.h.bf16 %v184
  %v433 = vunpack.c.l.bf16 %v185
  %v434 = vunpack.c.h.bf16 %v185
  %v435 = vunpack.c.l.bf16 %v186
  %v436 = vunpack.c.h.bf16 %v186
  %v437 = vunpack.c.l.bf16 %v187
  %v438 = vunpack.c.h.bf16 %v187
  %v439 = vunpack.c.l.bf16 %v188
  %v440 = vunpack.c.h.bf16 %v188
  %v441 = vunpack.c.l.bf16 %v189
  %v442 = vunpack.c.h.bf16 %v189
  %v443 = vunpack.c.l.bf16 %v190
  %v444 = vunpack.c.h.bf16 %v190
  %v445 = vunpack.c.l.bf16 %v191
  %v446 = vunpack.c.h.bf16 %v191
  %v447 = vunpack.c.l.bf16 %v192
  %v448 = vunpack.c.h.bf16 %v192
  %449 = vmatpush.msra.mxu0 %v313
  %450 = vmatpush.msra.mxu0 %v305
  %451 = vmatpush.msra.mxu0 %v297
  %452 = vmatpush.msra.mxu0 %v289
  %453 = vmatpush.msra.mxu0 %v281
  %454 = vmatpush.msra.mxu0 %v273
  %455 = vmatpush.msra.mxu0 %v265
  %456 = vmatpush.msra.mxu0 %v257
  %457 = vmatpush.msra.mxu0 %v249
  %458 = vmatpush.msra.mxu0 %v241
  %459 = vmatpush.msra.mxu0 %v233
  %460 = vmatpush.msra.mxu0 %v225
  %461 = vmatpush.msra.mxu0 %v217
  %462 = vmatpush.msra.mxu0 %v209
  %463 = vmatpush.msra.mxu0 %v201
  %464 = vmatpush.msra.mxu0 %v193
  %465 = vmatmul.f32.gmra.mxu0 %v63
  %v466 = vpop.f32.mrf.mxu0
  %v467 = vadd.f32 0.0, %v466
  %468 = vdwg.mxu0
  %469 = vmatpush.msra.mxu0 %v441
  %470 = vmatpush.msra.mxu0 %v433
  %471 = vmatpush.msra.mxu0 %v425
  %472 = vmatpush.msra.mxu0 %v417
  %473 = vmatpush.msra.mxu0 %v409
  %474 = vmatpush.msra.mxu0 %v401
  %475 = vmatpush.msra.mxu0 %v393
  %476 = vmatpush.msra.mxu0 %v385
  %477 = vmatpush.msra.mxu0 %v377
  %478 = vmatpush.msra.mxu0 %v369
  %479 = vmatpush.msra.mxu0 %v361
  %480 = vmatpush.msra.mxu0 %v353
  %481 = vmatpush.msra.mxu0 %v345
  %482 = vmatpush.msra.mxu0 %v337
  %483 = vmatpush.msra.mxu0 %v329
  %484 = vmatpush.msra.mxu0 %v321
  %485 = vmatmul.f32.gmra.mxu0 %v64
  %v486 = vpop.f32.mrf.mxu0
  %v487 = vadd.f32 %v467, %v486
  %488 = vdwg.mxu0
  %489 = vmatpush.msra.mxu0 %v314
  %490 = vmatpush.msra.mxu0 %v306
  %491 = vmatpush.msra.mxu0 %v298
  %492 = vmatpush.msra.mxu0 %v290
  %493 = vmatpush.msra.mxu0 %v282
  %494 = vmatpush.msra.mxu0 %v274
  %495 = vmatpush.msra.mxu0 %v266
  %496 = vmatpush.msra.mxu0 %v258
  %497 = vmatpush.msra.mxu0 %v250
  %498 = vmatpush.msra.mxu0 %v242
  %499 = vmatpush.msra.mxu0 %v234
  %500 = vmatpush.msra.mxu0 %v226
  %501 = vmatpush.msra.mxu0 %v218
  %502 = vmatpush.msra.mxu0 %v210
  %503 = vmatpush.msra.mxu0 %v202
  %504 = vmatpush.msra.mxu0 %v194
  %505 = vmatmul.f32.gmra.mxu0 %v63
  %v506 = vpop.f32.mrf.mxu0
  %v507 = vadd.f32 0.0, %v506
  %508 = vdwg.mxu0
  %509 = vmatpush.msra.mxu0 %v442
  %510 = vmatpush.msra.mxu0 %v434
  %511 = vmatpush.msra.mxu0 %v426
  %512 = vmatpush.msra.mxu0 %v418
  %513 = vmatpush.msra.mxu0 %v410
  %514 = vmatpush.msra.mxu0 %v402
  %515 = vmatpush.msra.mxu0 %v394
  %516 = vmatpush.msra.mxu0 %v386
  %517 = vmatpush.msra.mxu0 %v378
  %518 = vmatpush.msra.mxu0 %v370
  %519 = vmatpush.msra.mxu0 %v362
  %520 = vmatpush.msra.mxu0 %v354
  %521 = vmatpush.msra.mxu0 %v346
  %522 = vmatpush.msra.mxu0 %v338
  %523 = vmatpush.msra.mxu0 %v330
  %524 = vmatpush.msra.mxu0 %v322
  %525 = vmatmul.f32.gmra.mxu0 %v64
  %v526 = vpop.f32.mrf.mxu0
  %v527 = vadd.f32 %v507, %v526
  %528 = vdwg.mxu0
  %529 = vmatpush.msra.mxu0 %v315
  %530 = vmatpush.msra.mxu0 %v307
  %531 = vmatpush.msra.mxu0 %v299
  %532 = vmatpush.msra.mxu0 %v291
  %533 = vmatpush.msra.mxu0 %v283
  %534 = vmatpush.msra.mxu0 %v275
  %535 = vmatpush.msra.mxu0 %v267
  %536 = vmatpush.msra.mxu0 %v259
  %537 = vmatpush.msra.mxu0 %v251
  %538 = vmatpush.msra.mxu0 %v243
  %539 = vmatpush.msra.mxu0 %v235
  %540 = vmatpush.msra.mxu0 %v227
  %541 = vmatpush.msra.mxu0 %v219
  %542 = vmatpush.msra.mxu0 %v211
  %543 = vmatpush.msra.mxu0 %v203
  %544 = vmatpush.msra.mxu0 %v195
  %545 = vmatmul.f32.gmra.mxu0 %v63
  %v546 = vpop.f32.mrf.mxu0
  %v547 = vadd.f32 0.0, %v546
  %548 = vdwg.mxu0
  %549 = vmatpush.msra.mxu0 %v443
  %550 = vmatpush.msra.mxu0 %v435
  %551 = vmatpush.msra.mxu0 %v427
  %552 = vmatpush.msra.mxu0 %v419
  %553 = vmatpush.msra.mxu0 %v411
  %554 = vmatpush.msra.mxu0 %v403
  %555 = vmatpush.msra.mxu0 %v395
  %556 = vmatpush.msra.mxu0 %v387
  %557 = vmatpush.msra.mxu0 %v379
  %558 = vmatpush.msra.mxu0 %v371
  %559 = vmatpush.msra.mxu0 %v363
  %560 = vmatpush.msra.mxu0 %v355
  %561 = vmatpush.msra.mxu0 %v347
  %562 = vmatpush.msra.mxu0 %v339
  %563 = vmatpush.msra.mxu0 %v331
  %564 = vmatpush.msra.mxu0 %v323
  %565 = vmatmul.f32.gmra.mxu0 %v64
  %v566 = vpop.f32.mrf.mxu0
  %v567 = vadd.f32 %v547, %v566
  %568 = vdwg.mxu0
  %569 = vmatpush.msra.mxu0 %v316
  %570 = vmatpush.msra.mxu0 %v308
  %571 = vmatpush.msra.mxu0 %v300
  %572 = vmatpush.msra.mxu0 %v292
  %573 = vmatpush.msra.mxu0 %v284
  %574 = vmatpush.msra.mxu0 %v276
  %575 = vmatpush.msra.mxu0 %v268
  %576 = vmatpush.msra.mxu0 %v260
  %577 = vmatpush.msra.mxu0 %v252
  %578 = vmatpush.msra.mxu0 %v244
  %579 = vmatpush.msra.mxu0 %v236
  %580 = vmatpush.msra.mxu0 %v228
  %581 = vmatpush.msra.mxu0 %v220
  %582 = vmatpush.msra.mxu0 %v212
  %583 = vmatpush.msra.mxu0 %v204
  %584 = vmatpush.msra.mxu0 %v196
  %585 = vmatmul.f32.gmra.mxu0 %v63
  %v586 = vpop.f32.mrf.mxu0
  %v587 = vadd.f32 0.0, %v586
  %588 = vdwg.mxu0
  %589 = vmatpush.msra.mxu0 %v444
  %590 = vmatpush.msra.mxu0 %v436
  %591 = vmatpush.msra.mxu0 %v428
  %592 = vmatpush.msra.mxu0 %v420
  %593 = vmatpush.msra.mxu0 %v412
  %594 = vmatpush.msra.mxu0 %v404
  %595 = vmatpush.msra.mxu0 %v396
  %596 = vmatpush.msra.mxu0 %v388
  %597 = vmatpush.msra.mxu0 %v380
  %598 = vmatpush.msra.mxu0 %v372
  %599 = vmatpush.msra.mxu0 %v364
  %600 = vmatpush.msra.mxu0 %v356
  %601 = vmatpush.msra.mxu0 %v348
  %602 = vmatpush.msra.mxu0 %v340
  %603 = vmatpush.msra.mxu0 %v332
  %604 = vmatpush.msra.mxu0 %v324
  %605 = vmatmul.f32.gmra.mxu0 %v64
  %v606 = vpop.f32.mrf.mxu0
  %v607 = vadd.f32 %v587, %v606
  %608 = vdwg.mxu0
  %609 = vmatpush.msra.mxu0 %v317
  %610 = vmatpush.msra.mxu0 %v309
  %611 = vmatpush.msra.mxu0 %v301
  %612 = vmatpush.msra.mxu0 %v293
  %613 = vmatpush.msra.mxu0 %v285
  %614 = vmatpush.msra.mxu0 %v277
  %615 = vmatpush.msra.mxu0 %v269
  %616 = vmatpush.msra.mxu0 %v261
  %617 = vmatpush.msra.mxu0 %v253
  %618 = vmatpush.msra.mxu0 %v245
  %619 = vmatpush.msra.mxu0 %v237
  %620 = vmatpush.msra.mxu0 %v229
  %621 = vmatpush.msra.mxu0 %v221
  %622 = vmatpush.msra.mxu0 %v213
  %623 = vmatpush.msra.mxu0 %v205
  %624 = vmatpush.msra.mxu0 %v197
  %625 = vmatmul.f32.gmra.mxu0 %v63
  %v626 = vpop.f32.mrf.mxu0
  %v627 = vadd.f32 0.0, %v626
  %628 = vdwg.mxu0
  %629 = vmatpush.msra.mxu0 %v445
  %630 = vmatpush.msra.mxu0 %v437
  %631 = vmatpush.msra.mxu0 %v429
  %632 = vmatpush.msra.mxu0 %v421
  %633 = vmatpush.msra.mxu0 %v413
  %634 = vmatpush.msra.mxu0 %v405
  %635 = vmatpush.msra.mxu0 %v397
  %636 = vmatpush.msra.mxu0 %v389
  %637 = vmatpush.msra.mxu0 %v381
  %638 = vmatpush.msra.mxu0 %v373
  %639 = vmatpush.msra.mxu0 %v365
  %640 = vmatpush.msra.mxu0 %v357
  %641 = vmatpush.msra.mxu0 %v349
  %642 = vmatpush.msra.mxu0 %v341
  %643 = vmatpush.msra.mxu0 %v333
  %644 = vmatpush.msra.mxu0 %v325
  %645 = vmatmul.f32.gmra.mxu0 %v64
  %v646 = vpop.f32.mrf.mxu0
  %v647 = vadd.f32 %v627, %v646
  %648 = vdwg.mxu0
  %649 = vmatpush.msra.mxu0 %v318
  %650 = vmatpush.msra.mxu0 %v310
  %651 = vmatpush.msra.mxu0 %v302
  %652 = vmatpush.msra.mxu0 %v294
  %653 = vmatpush.msra.mxu0 %v286
  %654 = vmatpush.msra.mxu0 %v278
  %655 = vmatpush.msra.mxu0 %v270
  %656 = vmatpush.msra.mxu0 %v262
  %657 = vmatpush.msra.mxu0 %v254
  %658 = vmatpush.msra.mxu0 %v246
  %659 = vmatpush.msra.mxu0 %v238
  %660 = vmatpush.msra.mxu0 %v230
  %661 = vmatpush.msra.mxu0 %v222
  %662 = vmatpush.msra.mxu0 %v214
  %663 = vmatpush.msra.mxu0 %v206
  %664 = vmatpush.msra.mxu0 %v198
  %665 = vmatmul.f32.gmra.mxu0 %v63
  %v666 = vpop.f32.mrf.mxu0
  %v667 = vadd.f32 0.0, %v666
  %668 = vdwg.mxu0
  %669 = vmatpush.msra.mxu0 %v446
  %670 = vmatpush.msra.mxu0 %v438
  %671 = vmatpush.msra.mxu0 %v430
  %672 = vmatpush.msra.mxu0 %v422
  %673 = vmatpush.msra.mxu0 %v414
  %674 = vmatpush.msra.mxu0 %v406
  %675 = vmatpush.msra.mxu0 %v398
  %676 = vmatpush.msra.mxu0 %v390
  %677 = vmatpush.msra.mxu0 %v382
  %678 = vmatpush.msra.mxu0 %v374
  %679 = vmatpush.msra.mxu0 %v366
  %680 = vmatpush.msra.mxu0 %v358
  %681 = vmatpush.msra.mxu0 %v350
  %682 = vmatpush.msra.mxu0 %v342
  %683 = vmatpush.msra.mxu0 %v334
  %684 = vmatpush.msra.mxu0 %v326
  %685 = vmatmul.f32.gmra.mxu0 %v64
  %v686 = vpop.f32.mrf.mxu0
  %v687 = vadd.f32 %v667, %v686
  %688 = vdwg.mxu0
  %689 = vmatpush.msra.mxu0 %v319
  %690 = vmatpush.msra.mxu0 %v311
  %691 = vmatpush.msra.mxu0 %v303
  %692 = vmatpush.msra.mxu0 %v295
  %693 = vmatpush.msra.mxu0 %v287
  %694 = vmatpush.msra.mxu0 %v279
  %695 = vmatpush.msra.mxu0 %v271
  %696 = vmatpush.msra.mxu0 %v263
  %697 = vmatpush.msra.mxu0 %v255
  %698 = vmatpush.msra.mxu0 %v247
  %699 = vmatpush.msra.mxu0 %v239
  %700 = vmatpush.msra.mxu0 %v231
  %701 = vmatpush.msra.mxu0 %v223
  %702 = vmatpush.msra.mxu0 %v215
  %703 = vmatpush.msra.mxu0 %v207
  %704 = vmatpush.msra.mxu0 %v199
  %705 = vmatmul.f32.gmra.mxu0 %v63
  %v706 = vpop.f32.mrf.mxu0
  %v707 = vadd.f32 0.0, %v706
  %708 = vdwg.mxu0
  %709 = vmatpush.msra.mxu0 %v447
  %710 = vmatpush.msra.mxu0 %v439
  %711 = vmatpush.msra.mxu0 %v431
  %712 = vmatpush.msra.mxu0 %v423
  %713 = vmatpush.msra.mxu0 %v415
  %714 = vmatpush.msra.mxu0 %v407
  %715 = vmatpush.msra.mxu0 %v399
  %716 = vmatpush.msra.mxu0 %v391
  %717 = vmatpush.msra.mxu0 %v383
  %718 = vmatpush.msra.mxu0 %v375
  %719 = vmatpush.msra.mxu0 %v367
  %720 = vmatpush.msra.mxu0 %v359
  %721 = vmatpush.msra.mxu0 %v351
  %722 = vmatpush.msra.mxu0 %v343
  %723 = vmatpush.msra.mxu0 %v335
  %724 = vmatpush.msra.mxu0 %v327
  %725 = vmatmul.f32.gmra.mxu0 %v64
  %v726 = vpop.f32.mrf.mxu0
  %v727 = vadd.f32 %v707, %v726
  %728 = vdwg.mxu0
  %729 = vmatpush.msra.mxu0 %v320
  %730 = vmatpush.msra.mxu0 %v312
  %731 = vmatpush.msra.mxu0 %v304
  %732 = vmatpush.msra.mxu0 %v296
  %733 = vmatpush.msra.mxu0 %v288
  %734 = vmatpush.msra.mxu0 %v280
  %735 = vmatpush.msra.mxu0 %v272
  %736 = vmatpush.msra.mxu0 %v264
  %737 = vmatpush.msra.mxu0 %v256
  %738 = vmatpush.msra.mxu0 %v248
  %739 = vmatpush.msra.mxu0 %v240
  %740 = vmatpush.msra.mxu0 %v232
  %741 = vmatpush.msra.mxu0 %v224
  %742 = vmatpush.msra.mxu0 %v216
  %743 = vmatpush.msra.mxu0 %v208
  %744 = vmatpush.msra.mxu0 %v200
  %745 = vmatmul.f32.gmra.mxu0 %v63
  %v746 = vpop.f32.mrf.mxu0
  %v747 = vadd.f32 0.0, %v746
  %748 = vdwg.mxu0
  %749 = vmatpush.msra.mxu0 %v448
  %750 = vmatpush.msra.mxu0 %v440
  %751 = vmatpush.msra.mxu0 %v432
  %752 = vmatpush.msra.mxu0 %v424
  %753 = vmatpush.msra.mxu0 %v416
  %754 = vmatpush.msra.mxu0 %v408
  %755 = vmatpush.msra.mxu0 %v400
  %756 = vmatpush.msra.mxu0 %v392
  %757 = vmatpush.msra.mxu0 %v384
  %758 = vmatpush.msra.mxu0 %v376
  %759 = vmatpush.msra.mxu0 %v368
  %760 = vmatpush.msra.mxu0 %v360
  %761 = vmatpush.msra.mxu0 %v352
  %762 = vmatpush.msra.mxu0 %v344
  %763 = vmatpush.msra.mxu0 %v336
  %764 = vmatpush.msra.mxu0 %v328
  %765 = vmatmul.f32.gmra.mxu0 %v64
  %v766 = vpop.f32.mrf.mxu0
  %v767 = vadd.f32 %v747, %v766
  %768 = vdwg.mxu0
  %770 = vrot.lane.b32.xlu0 %v487, 64
  %v771 = vpop.permute.xlu0 %770
  %774 = vrot.lane.b32.xlu0 %v527, 64
  %v775 = vpop.permute.xlu0 %774
  %778 = vrot.lane.b32.xlu0 %v567, 64
  %v779 = vpop.permute.xlu0 %778
  %782 = vrot.lane.b32.xlu0 %v607, 64
  %v783 = vpop.permute.xlu0 %782
  %786 = vrot.lane.b32.xlu0 %v647, 64
  %v787 = vpop.permute.xlu0 %786
  %790 = vrot.lane.b32.xlu0 %v687, 64
  %v791 = vpop.permute.xlu0 %790
  %794 = vrot.lane.b32.xlu0 %v727, 64
  %v795 = vpop.permute.xlu0 %794
  %798 = vrot.lane.b32.xlu0 %v767, 64
  %v799 = vpop.permute.xlu0 %798
  %v801 = vld [vmem:[%s6] sm:$0xff]
  %v802 = vld [vmem:[%s6 + $0x8] sm:$0xff]
  %v803 = vld [vmem:[%s7] sm:$0xff]
  %v804 = vld [vmem:[%s7 + $0x8] sm:$0xff]
  %806 = vset.pattern.permute.xlu0 0
  %807 = vperm.xlu0 %806, %v803
  %v808 = vpop.permute.xlu0 %807
  %811 = vset.pattern.permute.xlu0 0
  %812 = vperm.xlu0 %811, %v804
  %v813 = vpop.permute.xlu0 %812
  %815 = vmatpush.msra.mxu0 %v799
  %816 = vmatpush.msra.mxu0 %v767
  %817 = vmatpush.msra.mxu0 %v795
  %818 = vmatpush.msra.mxu0 %v727
  %819 = vmatpush.msra.mxu0 %v791
  %820 = vmatpush.msra.mxu0 %v687
  %821 = vmatpush.msra.mxu0 %v787
  %822 = vmatpush.msra.mxu0 %v647
  %823 = vmatpush.msra.mxu0 %v783
  %824 = vmatpush.msra.mxu0 %v607
  %825 = vmatpush.msra.mxu0 %v779
  %826 = vmatpush.msra.mxu0 %v567
  %827 = vmatpush.msra.mxu0 %v775
  %828 = vmatpush.msra.mxu0 %v527
  %829 = vmatpush.msra.mxu0 %v771
  %830 = vmatpush.msra.mxu0 %v487
  %831 = vmatmul.f32.gmra.mxu0 %v801
  %v832 = vpop.f32.mrf.mxu0
  %v833 = vadd.f32 %v808, %v832
  %834 = vmatmul.f32.gmra.mxu0 %v802
  %v835 = vpop.f32.mrf.mxu0
  %v836 = vadd.f32 %v813, %v835
  %837 = vdwg.mxu0
  %vm838 = vcmp.ge.f32.partialorder %v833, 0.0
  %vm839 = vcmp.ge.f32.partialorder %v836, 0.0
  %v840 = vmul.f32 %v833, 0.2
  %v841 = vmul.f32 %v836, 0.2
  %v842 = vsel %vm838, %v833, %v840
  %v843 = vsel %vm839, %v836, %v841
  %v844 = vld [vmem:[%s2] sm:$0xff]
  %v845 = vld [vmem:[%s2 + $0x8] sm:$0xff]
  %v846 = vld [vmem:[%s2 + $0x10] sm:$0xff]
  %v847 = vld [vmem:[%s2 + $0x18] sm:$0xff]
  %v848 = vld [vmem:[%s2 + $0x20] sm:$0xff]
  %v849 = vld [vmem:[%s2 + $0x28] sm:$0xff]
  %v850 = vld [vmem:[%s2 + $0x30] sm:$0xff]
  %v851 = vld [vmem:[%s2 + $0x38] sm:$0xff]
  %v852 = vunpack.c.l.bf16 %v844
  %v853 = vunpack.c.h.bf16 %v844
  %v854 = vunpack.c.l.bf16 %v845
  %v855 = vunpack.c.h.bf16 %v845
  %v856 = vunpack.c.l.bf16 %v846
  %v857 = vunpack.c.h.bf16 %v846
  %v858 = vunpack.c.l.bf16 %v847
  %v859 = vunpack.c.h.bf16 %v847
  %v860 = vunpack.c.l.bf16 %v848
  %v861 = vunpack.c.h.bf16 %v848
  %v862 = vunpack.c.l.bf16 %v849
  %v863 = vunpack.c.h.bf16 %v849
  %v864 = vunpack.c.l.bf16 %v850
  %v865 = vunpack.c.h.bf16 %v850
  %v866 = vunpack.c.l.bf16 %v851
  %v867 = vunpack.c.h.bf16 %v851
  %vm868 = vcmask 523264
  %v870 = vsel %vm868, %v842, 0
  %v873 = vsel %vm868, %v843, 0
  %875 = vmatpush.msra.mxu0 0.0
  %876 = vmatpush.msra.mxu0 0.0
  %877 = vmatpush.msra.mxu0 0.0
  %878 = vmatpush.msra.mxu0 0.0
  %879 = vmatpush.msra.mxu0 0.0
  %880 = vmatpush.msra.mxu0 0.0
  %881 = vmatpush.msra.mxu0 0.0
  %882 = vmatpush.msra.mxu0 0.0
  %883 = vmatpush.msra.mxu0 %v866
  %884 = vmatpush.msra.mxu0 %v864
  %885 = vmatpush.msra.mxu0 %v862
  %886 = vmatpush.msra.mxu0 %v860
  %887 = vmatpush.msra.mxu0 %v858
  %888 = vmatpush.msra.mxu0 %v856
  %889 = vmatpush.msra.mxu0 %v854
  %890 = vmatpush.msra.mxu0 %v852
  %891 = vmatmul.f32.gmra.mxu0 %v870
  %v892 = vpop.f32.mrf.mxu0
  %v893 = vadd.f32 0.0, %v892
  %894 = vmatmul.f32.gmra.mxu0 %v873
  %v895 = vpop.f32.mrf.mxu0
  %v896 = vadd.f32 0.0, %v895
  %897 = vdwg.mxu0
  %898 = vmatpush.msra.mxu0 0.0
  %899 = vmatpush.msra.mxu0 0.0
  %900 = vmatpush.msra.mxu0 0.0
  %901 = vmatpush.msra.mxu0 0.0
  %902 = vmatpush.msra.mxu0 0.0
  %903 = vmatpush.msra.mxu0 0.0
  %904 = vmatpush.msra.mxu0 0.0
  %905 = vmatpush.msra.mxu0 0.0
  %906 = vmatpush.msra.mxu0 %v867
  %907 = vmatpush.msra.mxu0 %v865
  %908 = vmatpush.msra.mxu0 %v863
  %909 = vmatpush.msra.mxu0 %v861
  %910 = vmatpush.msra.mxu0 %v859
  %911 = vmatpush.msra.mxu0 %v857
  %912 = vmatpush.msra.mxu0 %v855
  %913 = vmatpush.msra.mxu0 %v853
  %914 = vmatmul.f32.gmra.mxu0 %v870
  %v915 = vpop.f32.mrf.mxu0
  %v916 = vadd.f32 0.0, %v915
  %917 = vmatmul.f32.gmra.mxu0 %v873
  %v918 = vpop.f32.mrf.mxu0
  %v919 = vadd.f32 0.0, %v918
  %920 = vdwg.mxu0
  %923 = vrot.lane.b32.xlu0 %v893, 112
  %v924 = vpop.permute.xlu0 %923
  %925 = vrot.lane.b32.xlu0 %v896, 112
  %v926 = vpop.permute.xlu0 %925
  %929 = vrot.lane.b32.xlu0 %v893, 96
  %v930 = vpop.permute.xlu0 %929
  %931 = vrot.lane.b32.xlu0 %v896, 96
  %v932 = vpop.permute.xlu0 %931
  %935 = vrot.lane.b32.xlu0 %v893, 80
  %v936 = vpop.permute.xlu0 %935
  %937 = vrot.lane.b32.xlu0 %v896, 80
  %v938 = vpop.permute.xlu0 %937
  %941 = vrot.lane.b32.xlu0 %v893, 64
  %v942 = vpop.permute.xlu0 %941
  %943 = vrot.lane.b32.xlu0 %v896, 64
  %v944 = vpop.permute.xlu0 %943
  %947 = vrot.lane.b32.xlu0 %v893, 48
  %v948 = vpop.permute.xlu0 %947
  %949 = vrot.lane.b32.xlu0 %v896, 48
  %v950 = vpop.permute.xlu0 %949
  %953 = vrot.lane.b32.xlu0 %v893, 32
  %v954 = vpop.permute.xlu0 %953
  %955 = vrot.lane.b32.xlu0 %v896, 32
  %v956 = vpop.permute.xlu0 %955
  %959 = vrot.lane.b32.xlu0 %v893, 16
  %v960 = vpop.permute.xlu0 %959
  %961 = vrot.lane.b32.xlu0 %v896, 16
  %v962 = vpop.permute.xlu0 %961
  %967 = vrot.lane.b32.xlu0 %v916, 112
  %v968 = vpop.permute.xlu0 %967
  %969 = vrot.lane.b32.xlu0 %v919, 112
  %v970 = vpop.permute.xlu0 %969
  %973 = vrot.lane.b32.xlu0 %v916, 96
  %v974 = vpop.permute.xlu0 %973
  %975 = vrot.lane.b32.xlu0 %v919, 96
  %v976 = vpop.permute.xlu0 %975
  %979 = vrot.lane.b32.xlu0 %v916, 80
  %v980 = vpop.permute.xlu0 %979
  %981 = vrot.lane.b32.xlu0 %v919, 80
  %v982 = vpop.permute.xlu0 %981
  %985 = vrot.lane.b32.xlu0 %v916, 64
  %v986 = vpop.permute.xlu0 %985
  %987 = vrot.lane.b32.xlu0 %v919, 64
  %v988 = vpop.permute.xlu0 %987
  %991 = vrot.lane.b32.xlu0 %v916, 48
  %v992 = vpop.permute.xlu0 %991
  %993 = vrot.lane.b32.xlu0 %v919, 48
  %v994 = vpop.permute.xlu0 %993
  %997 = vrot.lane.b32.xlu0 %v916, 32
  %v998 = vpop.permute.xlu0 %997
  %999 = vrot.lane.b32.xlu0 %v919, 32
  %v1000 = vpop.permute.xlu0 %999
  %1003 = vrot.lane.b32.xlu0 %v916, 16
  %v1004 = vpop.permute.xlu0 %1003
  %1005 = vrot.lane.b32.xlu0 %v919, 16
  %v1006 = vpop.permute.xlu0 %1005
  %v1009 = vld [vmem:[%s8] sm:$0xff]
  %v1010 = vld [vmem:[%s8 + $0x8] sm:$0xff]
  %v1011 = vld [vmem:[%s8 + $0x10] sm:$0xff]
  %v1012 = vld [vmem:[%s8 + $0x18] sm:$0xff]
  %v1013 = vld [vmem:[%s8 + $0x20] sm:$0xff]
  %v1014 = vld [vmem:[%s8 + $0x28] sm:$0xff]
  %v1015 = vld [vmem:[%s8 + $0x30] sm:$0xff]
  %v1016 = vld [vmem:[%s8 + $0x38] sm:$0xff]
  %v1017 = vld [vmem:[%s9] sm:$0xff]
  %v1018 = vld [vmem:[%s9 + $0x8] sm:$0xff]
  %v1019 = vld [vmem:[%s9 + $0x10] sm:$0xff]
  %v1020 = vld [vmem:[%s9 + $0x18] sm:$0xff]
  %1022 = vset.pattern.permute.xlu0 0
  %1023 = vperm.xlu0 %1022, %v1017
  %v1024 = vpop.permute.xlu0 %1023
  %1027 = vset.pattern.permute.xlu0 0
  %1028 = vperm.xlu0 %1027, %v1018
  %v1029 = vpop.permute.xlu0 %1028
  %1032 = vset.pattern.permute.xlu0 0
  %1033 = vperm.xlu0 %1032, %v1019
  %v1034 = vpop.permute.xlu0 %1033
  %1037 = vset.pattern.permute.xlu0 0
  %1038 = vperm.xlu0 %1037, %v1020
  %v1039 = vpop.permute.xlu0 %1038
  %1041 = vmatpush.msra.mxu0 %v962
  %1042 = vmatpush.msra.mxu0 %v960
  %1043 = vmatpush.msra.mxu0 %v956
  %1044 = vmatpush.msra.mxu0 %v954
  %1045 = vmatpush.msra.mxu0 %v950
  %1046 = vmatpush.msra.mxu0 %v948
  %1047 = vmatpush.msra.mxu0 %v944
  %1048 = vmatpush.msra.mxu0 %v942
  %1049 = vmatpush.msra.mxu0 %v938
  %1050 = vmatpush.msra.mxu0 %v936
  %1051 = vmatpush.msra.mxu0 %v932
  %1052 = vmatpush.msra.mxu0 %v930
  %1053 = vmatpush.msra.mxu0 %v926
  %1054 = vmatpush.msra.mxu0 %v924
  %1055 = vmatpush.msra.mxu0 %v896
  %1056 = vmatpush.msra.mxu0 %v893
  %1057 = vmatmul.f32.gmra.mxu0 %v1009
  %v1058 = vpop.f32.mrf.mxu0
  %v1059 = vadd.f32 %v1024, %v1058
  %1060 = vmatmul.f32.gmra.mxu0 %v1011
  %v1061 = vpop.f32.mrf.mxu0
  %v1062 = vadd.f32 %v1029, %v1061
  %1063 = vmatmul.f32.gmra.mxu0 %v1013
  %v1064 = vpop.f32.mrf.mxu0
  %v1065 = vadd.f32 %v1034, %v1064
  %1066 = vmatmul.f32.gmra.mxu0 %v1015
  %v1067 = vpop.f32.mrf.mxu0
  %v1068 = vadd.f32 %v1039, %v1067
  %1069 = vdwg.mxu0
  %1070 = vmatpush.msra.mxu0 %v1006
  %1071 = vmatpush.msra.mxu0 %v1004
  %1072 = vmatpush.msra.mxu0 %v1000
  %1073 = vmatpush.msra.mxu0 %v998
  %1074 = vmatpush.msra.mxu0 %v994
  %1075 = vmatpush.msra.mxu0 %v992
  %1076 = vmatpush.msra.mxu0 %v988
  %1077 = vmatpush.msra.mxu0 %v986
  %1078 = vmatpush.msra.mxu0 %v982
  %1079 = vmatpush.msra.mxu0 %v980
  %1080 = vmatpush.msra.mxu0 %v976
  %1081 = vmatpush.msra.mxu0 %v974
  %1082 = vmatpush.msra.mxu0 %v970
  %1083 = vmatpush.msra.mxu0 %v968
  %1084 = vmatpush.msra.mxu0 %v919
  %1085 = vmatpush.msra.mxu0 %v916
  %1086 = vmatmul.f32.gmra.mxu0 %v1010
  %v1087 = vpop.f32.mrf.mxu0
  %v1088 = vadd.f32 %v1059, %v1087
  %1089 = vmatmul.f32.gmra.mxu0 %v1012
  %v1090 = vpop.f32.mrf.mxu0
  %v1091 = vadd.f32 %v1062, %v1090
  %1092 = vmatmul.f32.gmra.mxu0 %v1014
  %v1093 = vpop.f32.mrf.mxu0
  %v1094 = vadd.f32 %v1065, %v1093
  %1095 = vmatmul.f32.gmra.mxu0 %v1016
  %v1096 = vpop.f32.mrf.mxu0
  %v1097 = vadd.f32 %v1068, %v1096
  %1098 = vdwg.mxu0
  %vm1099 = vcmp.ge.f32.partialorder %v1088, 0.0
  %vm1100 = vcmp.ge.f32.partialorder %v1091, 0.0
  %vm1101 = vcmp.ge.f32.partialorder %v1094, 0.0
  %vm1102 = vcmp.ge.f32.partialorder %v1097, 0.0
  %v1103 = vmul.f32 %v1088, 0.2
  %v1104 = vmul.f32 %v1091, 0.2
  %v1105 = vmul.f32 %v1094, 0.2
  %v1106 = vmul.f32 %v1097, 0.2
  %v1107 = vsel %vm1099, %v1088, %v1103
  %v1108 = vsel %vm1100, %v1091, %v1104
  %v1109 = vsel %vm1101, %v1094, %v1105
  %v1110 = vsel %vm1102, %v1097, %v1106
  %v1111 = vld [vmem:[%s10] sm:$0x3]
  %v1112 = vld [vmem:[#allocation2] sm:$0x1]
  %v1114 = vperm.slane %v1112, 0
  %1115 = vset.pattern.permute.xlu0 0
  %1116 = vperm.xlu0 %1115, %v1114
  %v1117 = vpop.permute.xlu0 %1116
  %vm1119 = vcmask 261120
  %v1121 = vsel %vm1119, %v1111, 0
  %1123 = vmatpush.msra.mxu0 0.0
  %1124 = vmatpush.msra.mxu0 0.0
  %1125 = vmatpush.msra.mxu0 0.0
  %1126 = vmatpush.msra.mxu0 0.0
  %1127 = vmatpush.msra.mxu0 0.0
  %1128 = vmatpush.msra.mxu0 0.0
  %1129 = vmatpush.msra.mxu0 0.0
  %1130 = vmatpush.msra.mxu0 0.0
  %1131 = vmatpush.msra.mxu0 0.0
  %1132 = vmatpush.msra.mxu0 0.0
  %1133 = vmatpush.msra.mxu0 0.0
  %1134 = vmatpush.msra.mxu0 0.0
  %1135 = vmatpush.msra.mxu0 %v1110
  %1136 = vmatpush.msra.mxu0 %v1109
  %1137 = vmatpush.msra.mxu0 %v1108
  %1138 = vmatpush.msra.mxu0 %v1107
  %1139 = vmatmul.f32.gmra.mxu0 %v1121
  %v1140 = vpop.f32.mrf.mxu0
  %v1141 = vadd.f32 %v1117, %v1140
  %1142 = vdwg.mxu0
  %v1143 = vld [vmem:[%s4] sm:$0xff]
  %v1144 = vld [vmem:[%s4 + $0x8] sm:$0xff]
  %v1145 = vld [vmem:[%s4 + $0x10] sm:$0xff]
  %v1146 = vld [vmem:[%s4 + $0x18] sm:$0xff]
  %v1147 = vld [vmem:[%s4 + $0x20] sm:$0xff]
  %v1148 = vld [vmem:[%s4 + $0x28] sm:$0xff]
  %v1149 = vld [vmem:[%s4 + $0x30] sm:$0xff]
  %v1150 = vld [vmem:[%s4 + $0x38] sm:$0xff]
  %v1151 = vld [vmem:[%s4 + $0x40] sm:$0xff]
  %v1152 = vld [vmem:[%s4 + $0x48] sm:$0xff]
  %v1153 = vld [vmem:[%s4 + $0x50] sm:$0xff]
  %v1154 = vld [vmem:[%s4 + $0x58] sm:$0xff]
  %v1155 = vld [vmem:[%s4 + $0x60] sm:$0xff]
  %v1156 = vld [vmem:[%s4 + $0x68] sm:$0xff]
  %v1157 = vld [vmem:[%s4 + $0x70] sm:$0xff]
  %v1158 = vld [vmem:[%s4 + $0x78] sm:$0xff]
  %v1159 = vld [vmem:[%s4 + $0x80] sm:$0xff]
  %v1160 = vld [vmem:[%s4 + $0x88] sm:$0xff]
  %v1161 = vld [vmem:[%s4 + $0x90] sm:$0xff]
  %v1162 = vld [vmem:[%s4 + $0x98] sm:$0xff]
  %v1163 = vld [vmem:[%s4 + $0xa0] sm:$0xff]
  %v1164 = vld [vmem:[%s4 + $0xa8] sm:$0xff]
  %v1165 = vld [vmem:[%s4 + $0xb0] sm:$0xff]
  %v1166 = vld [vmem:[%s4 + $0xb8] sm:$0xff]
  %v1167 = vld [vmem:[%s4 + $0xc0] sm:$0xff]
  %v1168 = vld [vmem:[%s4 + $0xc8] sm:$0xff]
  %v1169 = vld [vmem:[%s4 + $0xd0] sm:$0xff]
  %v1170 = vld [vmem:[%s4 + $0xd8] sm:$0xff]
  %v1171 = vld [vmem:[%s4 + $0xe0] sm:$0xff]
  %v1172 = vld [vmem:[%s4 + $0xe8] sm:$0xff]
  %v1173 = vld [vmem:[%s4 + $0xf0] sm:$0xff]
  %v1174 = vld [vmem:[%s4 + $0xf8] sm:$0xff]
  %1175 = vmatpush.msra.mxu0 %v1158
  %1176 = vmatpush.msra.mxu0 %v1157
  %1177 = vmatpush.msra.mxu0 %v1156
  %1178 = vmatpush.msra.mxu0 %v1155
  %1179 = vmatpush.msra.mxu0 %v1154
  %1180 = vmatpush.msra.mxu0 %v1153
  %1181 = vmatpush.msra.mxu0 %v1152
  %1182 = vmatpush.msra.mxu0 %v1151
  %1183 = vmatpush.msra.mxu0 %v1150
  %1184 = vmatpush.msra.mxu0 %v1149
  %1185 = vmatpush.msra.mxu0 %v1148
  %1186 = vmatpush.msra.mxu0 %v1147
  %1187 = vmatpush.msra.mxu0 %v1146
  %1188 = vmatpush.msra.mxu0 %v1145
  %1189 = vmatpush.msra.mxu0 %v1144
  %1190 = vmatpush.msra.mxu0 %v1143
  %1191 = vmatmul.f32.gmra.mxu0 %v63
  %v1192 = vpop.f32.mrf.mxu0
  %v1193 = vadd.f32 0.0, %v1192
  %1194 = vdwg.mxu0
  %1195 = vmatpush.msra.mxu0 %v1174
  %1196 = vmatpush.msra.mxu0 %v1173
  %1197 = vmatpush.msra.mxu0 %v1172
  %1198 = vmatpush.msra.mxu0 %v1171
  %1199 = vmatpush.msra.mxu0 %v1170
  %1200 = vmatpush.msra.mxu0 %v1169
  %1201 = vmatpush.msra.mxu0 %v1168
  %1202 = vmatpush.msra.mxu0 %v1167
  %1203 = vmatpush.msra.mxu0 %v1166
  %1204 = vmatpush.msra.mxu0 %v1165
  %1205 = vmatpush.msra.mxu0 %v1164
  %1206 = vmatpush.msra.mxu0 %v1163
  %1207 = vmatpush.msra.mxu0 %v1162
  %1208 = vmatpush.msra.mxu0 %v1161
  %1209 = vmatpush.msra.mxu0 %v1160
  %1210 = vmatpush.msra.mxu0 %v1159
  %1211 = vmatmul.f32.gmra.mxu0 %v64
  %v1212 = vpop.f32.mrf.mxu0
  %v1213 = vadd.f32 %v1193, %v1212
  %1214 = vdwg.mxu0
  %v1216 = vsel %vm868, %v1213, 0
  %1218 = vmatpush.msra.mxu0 0.0
  %1219 = vmatpush.msra.mxu0 0.0
  %1220 = vmatpush.msra.mxu0 0.0
  %1221 = vmatpush.msra.mxu0 0.0
  %1222 = vmatpush.msra.mxu0 0.0
  %1223 = vmatpush.msra.mxu0 0.0
  %1224 = vmatpush.msra.mxu0 0.0
  %1225 = vmatpush.msra.mxu0 0.0
  %1226 = vmatpush.msra.mxu0 %v866
  %1227 = vmatpush.msra.mxu0 %v864
  %1228 = vmatpush.msra.mxu0 %v862
  %1229 = vmatpush.msra.mxu0 %v860
  %1230 = vmatpush.msra.mxu0 %v858
  %1231 = vmatpush.msra.mxu0 %v856
  %1232 = vmatpush.msra.mxu0 %v854
  %1233 = vmatpush.msra.mxu0 %v852
  %1234 = vmatmul.f32.gmra.mxu0 %v1216
  %v1235 = vpop.f32.mrf.mxu0
  %v1236 = vadd.f32 0.0, %v1235
  %1237 = vdwg.mxu0
  %1238 = vmatpush.msra.mxu0 0.0
  %1239 = vmatpush.msra.mxu0 0.0
  %1240 = vmatpush.msra.mxu0 0.0
  %1241 = vmatpush.msra.mxu0 0.0
  %1242 = vmatpush.msra.mxu0 0.0
  %1243 = vmatpush.msra.mxu0 0.0
  %1244 = vmatpush.msra.mxu0 0.0
  %1245 = vmatpush.msra.mxu0 0.0
  %1246 = vmatpush.msra.mxu0 %v867
  %1247 = vmatpush.msra.mxu0 %v865
  %1248 = vmatpush.msra.mxu0 %v863
  %1249 = vmatpush.msra.mxu0 %v861
  %1250 = vmatpush.msra.mxu0 %v859
  %1251 = vmatpush.msra.mxu0 %v857
  %1252 = vmatpush.msra.mxu0 %v855
  %1253 = vmatpush.msra.mxu0 %v853
  %1254 = vmatmul.f32.gmra.mxu0 %v1216
  %v1255 = vpop.f32.mrf.mxu0
  %v1256 = vadd.f32 0.0, %v1255
  %1257 = vdwg.mxu0
  %1259 = vrot.lane.b32.xlu0 %v1236, 112
  %v1260 = vpop.permute.xlu0 %1259
  %1262 = vrot.lane.b32.xlu0 %v1236, 96
  %v1263 = vpop.permute.xlu0 %1262
  %1265 = vrot.lane.b32.xlu0 %v1236, 80
  %v1266 = vpop.permute.xlu0 %1265
  %1268 = vrot.lane.b32.xlu0 %v1236, 64
  %v1269 = vpop.permute.xlu0 %1268
  %1271 = vrot.lane.b32.xlu0 %v1236, 48
  %v1272 = vpop.permute.xlu0 %1271
  %1274 = vrot.lane.b32.xlu0 %v1236, 32
  %v1275 = vpop.permute.xlu0 %1274
  %1277 = vrot.lane.b32.xlu0 %v1236, 16
  %v1278 = vpop.permute.xlu0 %1277
  %1281 = vrot.lane.b32.xlu0 %v1256, 112
  %v1282 = vpop.permute.xlu0 %1281
  %1284 = vrot.lane.b32.xlu0 %v1256, 96
  %v1285 = vpop.permute.xlu0 %1284
  %1287 = vrot.lane.b32.xlu0 %v1256, 80
  %v1288 = vpop.permute.xlu0 %1287
  %1290 = vrot.lane.b32.xlu0 %v1256, 64
  %v1291 = vpop.permute.xlu0 %1290
  %1293 = vrot.lane.b32.xlu0 %v1256, 48
  %v1294 = vpop.permute.xlu0 %1293
  %1296 = vrot.lane.b32.xlu0 %v1256, 32
  %v1297 = vpop.permute.xlu0 %1296
  %1299 = vrot.lane.b32.xlu0 %v1256, 16
  %v1300 = vpop.permute.xlu0 %1299
  %v1302 = vld [vmem:[%s12] sm:$0xff]
  %v1303 = vld [vmem:[%s12 + $0x8] sm:$0xff]
  %v1304 = vld [vmem:[%s13] sm:$0xff]
  %v1305 = vld [vmem:[%s13 + $0x8] sm:$0xff]
  %1307 = vset.pattern.permute.xlu0 0
  %1308 = vperm.xlu0 %1307, %v1304
  %v1309 = vpop.permute.xlu0 %1308
  %1312 = vset.pattern.permute.xlu0 0
  %1313 = vperm.xlu0 %1312, %v1305
  %v1314 = vpop.permute.xlu0 %1313
  %1316 = vmatpush.msra.mxu0 %v1300
  %1317 = vmatpush.msra.mxu0 %v1297
  %1318 = vmatpush.msra.mxu0 %v1294
  %1319 = vmatpush.msra.mxu0 %v1291
  %1320 = vmatpush.msra.mxu0 %v1288
  %1321 = vmatpush.msra.mxu0 %v1285
  %1322 = vmatpush.msra.mxu0 %v1282
  %1323 = vmatpush.msra.mxu0 %v1256
  %1324 = vmatpush.msra.mxu0 %v1278
  %1325 = vmatpush.msra.mxu0 %v1275
  %1326 = vmatpush.msra.mxu0 %v1272
  %1327 = vmatpush.msra.mxu0 %v1269
  %1328 = vmatpush.msra.mxu0 %v1266
  %1329 = vmatpush.msra.mxu0 %v1263
  %1330 = vmatpush.msra.mxu0 %v1260
  %1331 = vmatpush.msra.mxu0 %v1236
  %1332 = vmatmul.f32.gmra.mxu0 %v1302
  %v1333 = vpop.f32.mrf.mxu0
  %v1334 = vadd.f32 %v1309, %v1333
  %1335 = vmatmul.f32.gmra.mxu0 %v1303
  %v1336 = vpop.f32.mrf.mxu0
  %v1337 = vadd.f32 %v1314, %v1336
  %1338 = vdwg.mxu0
  %vm1339 = vcmp.ge.f32.partialorder %v1334, 0.0
  %vm1340 = vcmp.ge.f32.partialorder %v1337, 0.0
  %v1341 = vmul.f32 %v1334, 0.2
  %v1342 = vmul.f32 %v1337, 0.2
  %v1343 = vsel %vm1339, %v1334, %v1341
  %v1344 = vsel %vm1340, %v1337, %v1342
  %v1345 = vld [vmem:[%s3] sm:$0xf]
  %v1346 = vld [vmem:[%s3 + $0x4] sm:$0xf]
  %v1347 = vunpack.c.l.bf16 %v1345
  %v1348 = vunpack.c.l.bf16 %v1346
  %vm1349 = vcmask 130048
  %v1351 = vsel %vm1349, %v1343, 0
  %v1354 = vsel %vm1349, %v1344, 0
  %1356 = vmatpush.msra.mxu0 0.0
  %1357 = vmatpush.msra.mxu0 0.0
  %1358 = vmatpush.msra.mxu0 0.0
  %1359 = vmatpush.msra.mxu0 0.0
  %1360 = vmatpush.msra.mxu0 0.0
  %1361 = vmatpush.msra.mxu0 0.0
  %1362 = vmatpush.msra.mxu0 0.0
  %1363 = vmatpush.msra.mxu0 0.0
  %1364 = vmatpush.msra.mxu0 0.0
  %1365 = vmatpush.msra.mxu0 0.0
  %1366 = vmatpush.msra.mxu0 0.0
  %1367 = vmatpush.msra.mxu0 0.0
  %1368 = vmatpush.msra.mxu0 0.0
  %1369 = vmatpush.msra.mxu0 0.0
  %1370 = vmatpush.msra.mxu0 %v1348
  %1371 = vmatpush.msra.mxu0 %v1347
  %1372 = vmatmul.f32.gmra.mxu0 %v1351
  %v1373 = vpop.f32.mrf.mxu0
  %v1374 = vadd.f32 0.0, %v1373
  %1375 = vmatmul.f32.gmra.mxu0 %v1354
  %v1376 = vpop.f32.mrf.mxu0
  %v1377 = vadd.f32 0.0, %v1376
  %1378 = vdwg.mxu0
  %1381 = vrot.lane.b32.xlu0 %v1374, 124
  %v1382 = vpop.permute.xlu0 %1381
  %1383 = vrot.lane.b32.xlu0 %v1377, 124
  %v1384 = vpop.permute.xlu0 %1383
  %1387 = vrot.lane.b32.xlu0 %v1374, 120
  %v1388 = vpop.permute.xlu0 %1387
  %1389 = vrot.lane.b32.xlu0 %v1377, 120
  %v1390 = vpop.permute.xlu0 %1389
  %1393 = vrot.lane.b32.xlu0 %v1374, 116
  %v1394 = vpop.permute.xlu0 %1393
  %1395 = vrot.lane.b32.xlu0 %v1377, 116
  %v1396 = vpop.permute.xlu0 %1395
  %1399 = vrot.lane.b32.xlu0 %v1374, 112
  %v1400 = vpop.permute.xlu0 %1399
  %1401 = vrot.lane.b32.xlu0 %v1377, 112
  %v1402 = vpop.permute.xlu0 %1401
  %1405 = vrot.lane.b32.xlu0 %v1374, 108
  %v1406 = vpop.permute.xlu0 %1405
  %1407 = vrot.lane.b32.xlu0 %v1377, 108
  %v1408 = vpop.permute.xlu0 %1407
  %1411 = vrot.lane.b32.xlu0 %v1374, 104
  %v1412 = vpop.permute.xlu0 %1411
  %1413 = vrot.lane.b32.xlu0 %v1377, 104
  %v1414 = vpop.permute.xlu0 %1413
  %1417 = vrot.lane.b32.xlu0 %v1374, 100
  %v1418 = vpop.permute.xlu0 %1417
  %1419 = vrot.lane.b32.xlu0 %v1377, 100
  %v1420 = vpop.permute.xlu0 %1419
  %1423 = vrot.lane.b32.xlu0 %v1374, 96
  %v1424 = vpop.permute.xlu0 %1423
  %1425 = vrot.lane.b32.xlu0 %v1377, 96
  %v1426 = vpop.permute.xlu0 %1425
  %1429 = vrot.lane.b32.xlu0 %v1374, 92
  %v1430 = vpop.permute.xlu0 %1429
  %1431 = vrot.lane.b32.xlu0 %v1377, 92
  %v1432 = vpop.permute.xlu0 %1431
  %1435 = vrot.lane.b32.xlu0 %v1374, 88
  %v1436 = vpop.permute.xlu0 %1435
  %1437 = vrot.lane.b32.xlu0 %v1377, 88
  %v1438 = vpop.permute.xlu0 %1437
  %1441 = vrot.lane.b32.xlu0 %v1374, 84
  %v1442 = vpop.permute.xlu0 %1441
  %1443 = vrot.lane.b32.xlu0 %v1377, 84
  %v1444 = vpop.permute.xlu0 %1443
  %1447 = vrot.lane.b32.xlu0 %v1374, 80
  %v1448 = vpop.permute.xlu0 %1447
  %1449 = vrot.lane.b32.xlu0 %v1377, 80
  %v1450 = vpop.permute.xlu0 %1449
  %1453 = vrot.lane.b32.xlu0 %v1374, 76
  %v1454 = vpop.permute.xlu0 %1453
  %1455 = vrot.lane.b32.xlu0 %v1377, 76
  %v1456 = vpop.permute.xlu0 %1455
  %1459 = vrot.lane.b32.xlu0 %v1374, 72
  %v1460 = vpop.permute.xlu0 %1459
  %1461 = vrot.lane.b32.xlu0 %v1377, 72
  %v1462 = vpop.permute.xlu0 %1461
  %1465 = vrot.lane.b32.xlu0 %v1374, 68
  %v1466 = vpop.permute.xlu0 %1465
  %1467 = vrot.lane.b32.xlu0 %v1377, 68
  %v1468 = vpop.permute.xlu0 %1467
  %v1471 = vld [vmem:[%s14] sm:$0xff]
  %v1472 = vld [vmem:[%s14 + $0x8] sm:$0xff]
  %v1473 = vld [vmem:[%s14 + $0x10] sm:$0xff]
  %v1474 = vld [vmem:[%s14 + $0x18] sm:$0xff]
  %v1475 = vld [vmem:[%s14 + $0x20] sm:$0xff]
  %v1476 = vld [vmem:[%s14 + $0x28] sm:$0xff]
  %v1477 = vld [vmem:[%s14 + $0x30] sm:$0xff]
  %v1478 = vld [vmem:[%s14 + $0x38] sm:$0xff]
  %v1479 = vld [vmem:[%s15] sm:$0xff]
  %v1480 = vld [vmem:[%s15 + $0x8] sm:$0xff]
  %v1481 = vld [vmem:[%s15 + $0x10] sm:$0xff]
  %v1482 = vld [vmem:[%s15 + $0x18] sm:$0xff]
  %1484 = vset.pattern.permute.xlu0 0
  %1485 = vperm.xlu0 %1484, %v1479
  %v1486 = vpop.permute.xlu0 %1485
  %1489 = vset.pattern.permute.xlu0 0
  %1490 = vperm.xlu0 %1489, %v1480
  %v1491 = vpop.permute.xlu0 %1490
  %1494 = vset.pattern.permute.xlu0 0
  %1495 = vperm.xlu0 %1494, %v1481
  %v1496 = vpop.permute.xlu0 %1495
  %1499 = vset.pattern.permute.xlu0 0
  %1500 = vperm.xlu0 %1499, %v1482
  %v1501 = vpop.permute.xlu0 %1500
  %1503 = vmatpush.msra.mxu0 %v1420
  %1504 = vmatpush.msra.mxu0 %v1418
  %1505 = vmatpush.msra.mxu0 %v1414
  %1506 = vmatpush.msra.mxu0 %v1412
  %1507 = vmatpush.msra.mxu0 %v1408
  %1508 = vmatpush.msra.mxu0 %v1406
  %1509 = vmatpush.msra.mxu0 %v1402
  %1510 = vmatpush.msra.mxu0 %v1400
  %1511 = vmatpush.msra.mxu0 %v1396
  %1512 = vmatpush.msra.mxu0 %v1394
  %1513 = vmatpush.msra.mxu0 %v1390
  %1514 = vmatpush.msra.mxu0 %v1388
  %1515 = vmatpush.msra.mxu0 %v1384
  %1516 = vmatpush.msra.mxu0 %v1382
  %1517 = vmatpush.msra.mxu0 %v1377
  %1518 = vmatpush.msra.mxu0 %v1374
  %1519 = vmatmul.f32.gmra.mxu0 %v1471
  %v1520 = vpop.f32.mrf.mxu0
  %v1521 = vadd.f32 %v1486, %v1520
  %1522 = vmatmul.f32.gmra.mxu0 %v1473
  %v1523 = vpop.f32.mrf.mxu0
  %v1524 = vadd.f32 %v1491, %v1523
  %1525 = vmatmul.f32.gmra.mxu0 %v1475
  %v1526 = vpop.f32.mrf.mxu0
  %v1527 = vadd.f32 %v1496, %v1526
  %1528 = vmatmul.f32.gmra.mxu0 %v1477
  %v1529 = vpop.f32.mrf.mxu0
  %v1530 = vadd.f32 %v1501, %v1529
  %1531 = vdwg.mxu0
  %1532 = vmatpush.msra.mxu0 %v1468
  %1533 = vmatpush.msra.mxu0 %v1466
  %1534 = vmatpush.msra.mxu0 %v1462
  %1535 = vmatpush.msra.mxu0 %v1460
  %1536 = vmatpush.msra.mxu0 %v1456
  %1537 = vmatpush.msra.mxu0 %v1454
  %1538 = vmatpush.msra.mxu0 %v1450
  %1539 = vmatpush.msra.mxu0 %v1448
  %1540 = vmatpush.msra.mxu0 %v1444
  %1541 = vmatpush.msra.mxu0 %v1442
  %1542 = vmatpush.msra.mxu0 %v1438
  %1543 = vmatpush.msra.mxu0 %v1436
  %1544 = vmatpush.msra.mxu0 %v1432
  %1545 = vmatpush.msra.mxu0 %v1430
  %1546 = vmatpush.msra.mxu0 %v1426
  %1547 = vmatpush.msra.mxu0 %v1424
  %1548 = vmatmul.f32.gmra.mxu0 %v1472
  %v1549 = vpop.f32.mrf.mxu0
  %v1550 = vadd.f32 %v1521, %v1549
  %1551 = vmatmul.f32.gmra.mxu0 %v1474
  %v1552 = vpop.f32.mrf.mxu0
  %v1553 = vadd.f32 %v1524, %v1552
  %1554 = vmatmul.f32.gmra.mxu0 %v1476
  %v1555 = vpop.f32.mrf.mxu0
  %v1556 = vadd.f32 %v1527, %v1555
  %1557 = vmatmul.f32.gmra.mxu0 %v1478
  %v1558 = vpop.f32.mrf.mxu0
  %v1559 = vadd.f32 %v1530, %v1558
  %1560 = vdwg.mxu0
  %vm1561 = vcmp.ge.f32.partialorder %v1550, 0.0
  %vm1562 = vcmp.ge.f32.partialorder %v1553, 0.0
  %vm1563 = vcmp.ge.f32.partialorder %v1556, 0.0
  %vm1564 = vcmp.ge.f32.partialorder %v1559, 0.0
  %v1565 = vmul.f32 %v1550, 0.2
  %v1566 = vmul.f32 %v1553, 0.2
  %v1567 = vmul.f32 %v1556, 0.2
  %v1568 = vmul.f32 %v1559, 0.2
  %v1569 = vsel %vm1561, %v1550, %v1565
  %v1570 = vsel %vm1562, %v1553, %v1566
  %v1571 = vsel %vm1563, %v1556, %v1567
  %v1572 = vsel %vm1564, %v1559, %v1568
  %v1573 = vld [vmem:[%s16] sm:$0x3]
  %v1574 = vld [vmem:[#allocation3] sm:$0x1]
  %v1576 = vperm.slane %v1574, 0
  %1577 = vset.pattern.permute.xlu0 0
  %1578 = vperm.xlu0 %1577, %v1576
  %v1579 = vpop.permute.xlu0 %1578
  %v1582 = vsel %vm1119, %v1573, 0
  %1584 = vmatpush.msra.mxu0 0.0
  %1585 = vmatpush.msra.mxu0 0.0
  %1586 = vmatpush.msra.mxu0 0.0
  %1587 = vmatpush.msra.mxu0 0.0
  %1588 = vmatpush.msra.mxu0 0.0
  %1589 = vmatpush.msra.mxu0 0.0
  %1590 = vmatpush.msra.mxu0 0.0
  %1591 = vmatpush.msra.mxu0 0.0
  %1592 = vmatpush.msra.mxu0 0.0
  %1593 = vmatpush.msra.mxu0 0.0
  %1594 = vmatpush.msra.mxu0 0.0
  %1595 = vmatpush.msra.mxu0 0.0
  %1596 = vmatpush.msra.mxu0 %v1572
  %1597 = vmatpush.msra.mxu0 %v1571
  %1598 = vmatpush.msra.mxu0 %v1570
  %1599 = vmatpush.msra.mxu0 %v1569
  %1600 = vmatmul.f32.gmra.mxu0 %v1582
  %v1601 = vpop.f32.mrf.mxu0
  %v1602 = vadd.f32 %v1579, %v1601
  %1603 = vdwg.mxu0
  %v1604 = vld [vmem:[%s5] sm:$0xff]
  %v1605 = vld [vmem:[%s5 + $0x8] sm:$0xff]
  %v1607 = vsel %vm1349, %v1141, 0
  %1609 = vmatpush.msra.mxu0 0.0
  %1610 = vmatpush.msra.mxu0 0.0
  %1611 = vmatpush.msra.mxu0 0.0
  %1612 = vmatpush.msra.mxu0 0.0
  %1613 = vmatpush.msra.mxu0 0.0
  %1614 = vmatpush.msra.mxu0 0.0
  %1615 = vmatpush.msra.mxu0 0.0
  %1616 = vmatpush.msra.mxu0 0.0
  %1617 = vmatpush.msra.mxu0 0.0
  %1618 = vmatpush.msra.mxu0 0.0
  %1619 = vmatpush.msra.mxu0 0.0
  %1620 = vmatpush.msra.mxu0 0.0
  %1621 = vmatpush.msra.mxu0 0.0
  %1622 = vmatpush.msra.mxu0 0.0
  %1623 = vmatpush.msra.mxu0 %v1605
  %1624 = vmatpush.msra.mxu0 %v1604
  %1625 = vmatmul.f32.gmra.mxu0 %v1607
  %v1626 = vpop.f32.mrf.mxu0
  %v1627 = vadd.f32 %v1602, %v1626
  %1628 = vdwg.mxu0
  %v1629 = vmul.f32 %v1627, 0.5
  %v1630 = vsub.f32 0.0, %v1629
  %v1631 = vmul.f32 %v1630, 1.442695
  %v1632 = vpow.pop %v1631
  %v1633 = vadd.f32 %v1632, 1.0
  %v1634 = vrcp.pop %v1633
  %v1635 = vmul.f32 %v1633, %v1634
  %v1636 = vsub.f32 1.0, %v1635
  %v1637 = vmul.f32 %v1634, %v1636
  %v1638 = vadd.f32 %v1634, %v1637
  %vm1639 = vweird.f32 %v1633
  %vm1640 = vweird.f32 %v1634
  %vm1641 = vmor %vm1639, %vm1640
  %v1642 = vsel %vm1641, %v1634, %v1638
  %v1643 = vand.u32 2147483647, %v1633
  %vm1644 = vcmp.eq.f32.partialorder %v1643, 8.507059e+37
  %v1645 = vand.u32 %v1633, 2147483648
  %v1646 = vor.u32 1.1754944e-38, %v1645
  %v1647 = vsel %vm1644, %v1646, %v1642
  %v1648 = vmul.f32 1.0, %v1647
  %vm1649 = vcmask 25600
  %1650 = vst.msk [vmem:[%s18] sm:$0x3] %vm1649, %v1648
  // Predicated region
  $region74: #{ms_image_dis_forward.1} parent=0 // pred_check
    _
  $region75: #{ms_image_dis_forward.1} parent=0 // pred_check_branch
    %1652 = sbr.rel (0) target = $region77
  $region76: #{ms_image_dis_forward.1} parent=0 // pred_region
    _
  $region77: #{ms_image_dis_forward.1} parent=0 // pred_fallthru
    _
  // Predicated region
  $region78: #{ms_image_dis_forward.1} parent=0 // pred_check
    _
  $region79: #{ms_image_dis_forward.1} parent=0 // pred_check_branch
    %1654 = sbr.rel (0) target = $region81
  $region80: #{ms_image_dis_forward.1} parent=0 // pred_region
    _
  $region81: #{ms_image_dis_forward.1} parent=0 // pred_fallthru
    _

</llo_original>
